<compile_context>
chip_gen: v7x
topology: tpu7x:2x2x1
jax: 0.10.0
libtpu: 0.0.40
codegen_flags: <defaults>
</compile_context>

<pallas_src>
import functools
from math import sqrt

import jax
import jax.numpy as jnp
from jax import lax
from jax.experimental import pallas as pl
from jax.experimental.pallas import tpu as pltpu


def _full_attention_kernel(q_ref, k_ref, v_ref, o_ref, a_ref=None, *,
                           scale, mxu_dtype):
    """One (batch, L-tile) grid step.

    q_ref: (TL, H, E)   k_ref: (S, H, E)   v_ref: (S, H, D)
    o_ref: (TL, H, D)   a_ref: (H, TL, S)  (present iff output_attention)
    """
    num_heads = q_ref.shape[1]                              # static

    for h in range(num_heads):    # unrolled; operands read per head from VMEM
        # Fold the softmax scale into Q (TL*E multiplies, E << S) and feed the
        # MXU its native dtype (bf16 on v5e/v6e/v7x); accumulate in f32.
        q_h = (q_ref[:, h, :] * scale).astype(mxu_dtype)    # (TL, E)
        k_h = k_ref[:, h, :].astype(mxu_dtype)              # (S, E)

        # scores = q_h @ k_h^T, contracting the shared E axis directly
        # (no transpose of the K operand before the MXU push).
        scores = lax.dot_general(
            q_h, k_h,
            dimension_numbers=(((1,), (1,)), ((), ())),
            preferred_element_type=jnp.float32)             # (TL, S)

        # Numerically stable softmax over S, kept in f32 (v5e-safe).
        m = jnp.max(scores, axis=-1, keepdims=True)
        e = jnp.exp(scores - m)
        denom = jnp.sum(e, axis=-1, keepdims=True)
        inv = pl.reciprocal(denom, approx=True)             # EUP slot

        v_h = v_ref[:, h, :].astype(mxu_dtype)              # (S, D)

        if a_ref is not None:
            attn = e * inv                                  # (TL, S)
            # H is the major dim of the A block, so this is a dense,
            # full-(TL, S) slab store (not a masked sublane store).
            a_ref[h] = attn.astype(a_ref.dtype)
            out = jnp.dot(attn.astype(mxu_dtype), v_h,
                          preferred_element_type=jnp.float32)   # (TL, D)
        else:
            # No attention map requested: normalize the (TL, D) result instead
            # of the (TL, S) matrix (~S/D x fewer VPU multiplies).
            out = jnp.dot(e.astype(mxu_dtype), v_h,
                          preferred_element_type=jnp.float32)   # (TL, D)
            out = out * inv

        o_ref[:, h, :] = out.astype(o_ref.dtype)            # native (L, H, D) layout


def _round_up(x, m):
    return ((x + m - 1) // m) * m


def _vmem_budget_and_limit():
    """(tile-footprint budget, scoped-VMEM limit) derived from the chip."""
    cap = None
    try:
        cap = int(getattr(pltpu.get_tpu_info(), "vmem_capacity_bytes", 0)) or None
    except Exception:
        cap = None
    if cap is None:
        cap = 64 * 1024 * 1024          # conservative default: v7x per-TC VMEM
    cap = max(32 * 1024 * 1024, min(cap, 128 * 1024 * 1024))     # sanity clamp
    budget = min((3 * cap) // 8, 48 * 1024 * 1024)   # what the padded tile model may use
    limit = min((3 * cap) // 4, 96 * 1024 * 1024)    # leave headroom for compiler scratch
    return budget, limit


def _choose_l_tile(L, S, H, E, D, q_itemsize, a_itemsize, vmem_budget,
                   min_l_tiles=1):
    """Largest legal L tile whose padded, double-buffered footprint fits."""
    sub_q = max(8, 32 // q_itemsize)                   # 8 sublanes f32, 16 bf16
    sub_a = max(8, 32 // a_itemsize) if a_itemsize else 8
    h_pad = _round_up(H, sub_q)                        # sublane padding of H
    e_pad = _round_up(E, 128)                          # lane padding
    d_pad = _round_up(D, 128)
    s_pad = _round_up(S, 128)

    kv_bytes = 2 * S * h_pad * (e_pad + d_pad) * q_itemsize     # K + V, 2 buffers

    def footprint(tl):
        qo = 2 * tl * h_pad * (e_pad + d_pad) * q_itemsize      # Q + O tiles, 2 buffers
        a = 2 * H * _round_up(tl, sub_a) * s_pad * a_itemsize if a_itemsize else 0
        return kv_bytes + qo + a

    # Upper bound on the tile (optionally force >= 2 L tiles for megacore).
    cap = L
    if min_l_tiles > 1 and L > 8:
        cap = max(8, _round_up(-(-L // min_l_tiles), 8))

    if cap >= L and footprint(L) <= vmem_budget:
        return L                                    # whole L axis in one tile
    start = min(_round_up(max(cap, 8), 8), 2048)
    fitting = [tl for tl in range(start, 7, -8) if footprint(tl) <= vmem_budget]
    if not fitting:
        return 8    # minimal legal tile; compiler reports OOM if even this fails
    for tl in fitting:
        if L % tl == 0:
            return tl                               # evenly dividing tile preferred
    return fitting[0]                               # ragged last tile (writes masked)


def full_attention(queries, keys, values, scale=None, output_attention=True,
                   attn_dtype=None, mxu_dtype=jnp.bfloat16):
    """queries: (B, L, H, E), keys: (B, S, H, E), values: (B, S, H, D).

    Returns (V, A) with V: (B, L, H, D) and A: (B, H, L, S) (A is None when
    output_attention=False) — matching PyTorch FullAttention.forward with
    dropout in eval mode.

    mxu_dtype: dtype fed to the MXU (accumulation is always f32).  bf16 is
      native on v5e/v6e/v7x; pass jnp.float32 for exact-f32 matmuls.
    attn_dtype: dtype of the returned attention map (defaults to the input
      dtype; jnp.bfloat16 halves the dominant HBM writeback).
    """
    B, L, H, E = queries.shape
    _, S, _, D = values.shape
    if scale is None:
        scale = 1.0 / sqrt(E)

    a_dtype = jnp.dtype(attn_dtype) if attn_dtype is not None else queries.dtype
    q_itemsize = jnp.dtype(queries.dtype).itemsize
    a_itemsize = jnp.dtype(a_dtype).itemsize if output_attention else 0

    vmem_budget, vmem_limit = _vmem_budget_and_limit()
    tl = _choose_l_tile(L, S, H, E, D, q_itemsize, a_itemsize, vmem_budget,
                        min_l_tiles=1 if B >= 2 else 2)
    n_l_tiles = pl.cdiv(L, tl)

    # Native-layout blocks: batch dim squeezed, full H and E/D as the last two
    # block dims (satisfies the (8,128) block rule with no wrapper transposes).
    # K/V index_maps ignore the L axis, so they stay resident across L tiles.
    in_specs = [
        pl.BlockSpec((None, tl, H, E), lambda b, l: (b, l, 0, 0)),   # Q
        pl.BlockSpec((None, S, H, E), lambda b, l: (b, 0, 0, 0)),    # K (resident)
        pl.BlockSpec((None, S, H, D), lambda b, l: (b, 0, 0, 0)),    # V (resident)
    ]
    out_shapes = [jax.ShapeDtypeStruct((B, L, H, D), queries.dtype)]
    out_specs = [pl.BlockSpec((None, tl, H, D), lambda b, l: (b, l, 0, 0))]
    if output_attention:
        out_shapes.append(jax.ShapeDtypeStruct((B, H, L, S), a_dtype))
        out_specs.append(pl.BlockSpec((None, H, tl, S), lambda b, l: (b, 0, l, 0)))

    kernel = functools.partial(_full_attention_kernel, scale=float(scale),
                               mxu_dtype=mxu_dtype)

    results = pl.pallas_call(
        kernel,
        out_shape=tuple(out_shapes),
        grid_spec=pltpu.PrefetchScalarGridSpec(
            num_scalar_prefetch=0,
            grid=(B, n_l_tiles),
            in_specs=in_specs,
            out_specs=out_specs,
        ),
        compiler_params=pltpu.CompilerParams(
            # Every (b, l) grid point is independent (no cross-tile
            # accumulator), so both axes can be sharded across TensorCores
            # (v7x megacore); L-parallel also covers the B == 1 case.
            dimension_semantics=("parallel", "parallel"),
            vmem_limit_bytes=int(vmem_limit),
        ),
    )(queries, keys, values)

    if output_attention:
        v_out, attn = results
        return v_out, attn
    return results[0], None


def _reference(queries, keys, values, scale=None):
    B, L, H, E = queries.shape
    if scale is None:
        scale = 1.0 / sqrt(E)
    scores = jnp.einsum('blhe,bshe->bhls', queries, keys)
    A = jax.nn.softmax(scale * scores, axis=-1)
    V = jnp.einsum('bhls,bshd->blhd', A, values)
    return V, A


if __name__ == "__main__":
    key = jax.random.PRNGKey(0)
    B, L, S, H, E, D = 2, 8, 8, 4, 32, 32
    kq, kk, kv = jax.random.split(key, 3)
    queries = jax.random.normal(kq, (B, L, H, E), dtype=jnp.float32)
    keys = jax.random.normal(kk, (B, S, H, E), dtype=jnp.float32)
    values = jax.random.normal(kv, (B, S, H, D), dtype=jnp.float32)

    v_out, attn = full_attention(queries, keys, values)
    jax.block_until_ready((v_out, attn))

    v_exp, a_exp = _reference(queries, keys, values)
    assert v_out.shape == (B, L, H, D)
    assert attn.shape == (B, H, L, S)
    # bf16 MXU inputs + approx reciprocal => ~1e-2 relative agreement; still
    # tight enough to catch any layout / indexing bug.
    assert jnp.allclose(v_out, v_exp, atol=2e-2, rtol=2e-2)
    assert jnp.allclose(attn, a_exp, atol=2e-2, rtol=2e-2)

    # output_attention=False fast path (skips the A writeback and the (TL, S)
    # normalization).
    v_only, a_none = full_attention(queries, keys, values,
                                    output_attention=False)
    jax.block_until_ready(v_only)
    assert a_none is None
    assert jnp.allclose(v_only, v_exp, atol=2e-2, rtol=2e-2)

    print("KERNEL_OK")
</pallas_src>

<mosaic_0001>
module attributes {stable_mosaic.version = 11 : i64} {
  func.func @_full_attention_kernel(%arg0: i32, %arg1: i32, %arg2: memref<1x8x4x32xf32, #tpu.memory_space<vmem>>, %arg3: memref<1x8x4x32xf32, #tpu.memory_space<vmem>>, %arg4: memref<1x8x4x32xf32, #tpu.memory_space<vmem>>, %arg5: memref<1x8x4x32xf32, #tpu.memory_space<vmem>>, %arg6: memref<1x4x8x8xf32, #tpu.memory_space<vmem>>) attributes {dimension_semantics = [#tpu.dimension_semantics<parallel>, #tpu.dimension_semantics<parallel>], iteration_bounds = array<i64: 2, 1>, scalar_prefetch = 0 : i64, scratch_operands = 0 : i64, tpu.core_type = #tpu.core_type<tc>, window_params = [{transform_indices = @transform_0, window_bounds = array<i64: 1, 8, 4, 32>}, {transform_indices = @transform_1, window_bounds = array<i64: 1, 8, 4, 32>}, {transform_indices = @transform_2, window_bounds = array<i64: 1, 8, 4, 32>}, {transform_indices = @transform_3, window_bounds = array<i64: 1, 8, 4, 32>}, {transform_indices = @transform_4, window_bounds = array<i64: 1, 4, 8, 8>}]} {
    %c0 = arith.constant 0 : index
    %c0_0 = arith.constant 0 : index
    %c0_1 = arith.constant 0 : index
    %c0_2 = arith.constant 0 : index
    %0 = vector.load %arg2[%c0, %c0_0, %c0_1, %c0_2] : memref<1x8x4x32xf32, #tpu.memory_space<vmem>>, vector<1x8x1x32xf32>
    %1 = vector.shape_cast %0 : vector<1x8x1x32xf32> to vector<8x32xf32>
    %cst = arith.constant 0.176776692 : f32
    %2 = vector.broadcast %cst : f32 to vector<8x32xf32>
    %3 = arith.mulf %1, %2 : vector<8x32xf32>
    %4 = arith.truncf %3 : vector<8x32xf32> to vector<8x32xbf16>
    %c0_3 = arith.constant 0 : index
    %c0_4 = arith.constant 0 : index
    %c0_5 = arith.constant 0 : index
    %c0_6 = arith.constant 0 : index
    %5 = vector.load %arg3[%c0_3, %c0_4, %c0_5, %c0_6] : memref<1x8x4x32xf32, #tpu.memory_space<vmem>>, vector<1x8x1x32xf32>
    %6 = vector.shape_cast %5 : vector<1x8x1x32xf32> to vector<8x32xf32>
    %7 = arith.truncf %6 : vector<8x32xf32> to vector<8x32xbf16>
    %cst_7 = arith.constant dense<0.000000e+00> : vector<8x8xf32>
    %8 = tpu.matmul %4, %7, %cst_7 {dimension_numbers = #tpu.dot_dimension_numbers<[1], [1], [0], [0], [0, 0, 1, 0], [], []>} : vector<8x32xbf16>, vector<8x32xbf16>, vector<8x8xf32> -> vector<8x8xf32>
    %cst_8 = arith.constant dense<0xFF800000> : vector<8xf32>
    %9 = vector.multi_reduction <maximumf>, %8, %cst_8 [1] : vector<8x8xf32> to vector<8xf32>
    %10 = vector.shape_cast %9 : vector<8xf32> to vector<8x1xf32>
    %11 = vector.broadcast %10 : vector<8x1xf32> to vector<8x8xf32>
    %12 = arith.subf %8, %11 : vector<8x8xf32>
    %13 = math.exp %12 : vector<8x8xf32>
    %cst_9 = arith.constant dense<0.000000e+00> : vector<8xf32>
    %14 = vector.multi_reduction <add>, %13, %cst_9 [1] : vector<8x8xf32> to vector<8xf32>
    %15 = vector.shape_cast %14 : vector<8xf32> to vector<8x1xf32>
    %16 = tpu.reciprocal %15 {approx = true} : vector<8x1xf32> -> vector<8x1xf32>
    %c0_10 = arith.constant 0 : index
    %c0_11 = arith.constant 0 : index
    %c0_12 = arith.constant 0 : index
    %c0_13 = arith.constant 0 : index
    %17 = vector.load %arg4[%c0_10, %c0_11, %c0_12, %c0_13] : memref<1x8x4x32xf32, #tpu.memory_space<vmem>>, vector<1x8x1x32xf32>
    %18 = vector.shape_cast %17 : vector<1x8x1x32xf32> to vector<8x32xf32>
    %19 = arith.truncf %18 : vector<8x32xf32> to vector<8x32xbf16>
    %20 = vector.broadcast %16 : vector<8x1xf32> to vector<8x8xf32>
    %21 = arith.mulf %13, %20 : vector<8x8xf32>
    %c0_14 = arith.constant 0 : index
    %c0_15 = arith.constant 0 : index
    %c0_16 = arith.constant 0 : index
    %c0_17 = arith.constant 0 : index
    %22 = vector.load %arg6[%c0_14, %c0_15, %c0_16, %c0_17] : memref<1x4x8x8xf32, #tpu.memory_space<vmem>>, vector<1x1x8x8xf32>
    %23 = vector.shape_cast %22 : vector<1x1x8x8xf32> to vector<8x8xf32>
    %24 = vector.shape_cast %21 : vector<8x8xf32> to vector<1x1x8x8xf32>
    tpu.vector_store %arg6[%c0_14, %c0_15, %c0_16, %c0_17], %24 {strides = array<i32>} : memref<1x4x8x8xf32, #tpu.memory_space<vmem>>, vector<1x1x8x8xf32>,
    %25 = arith.truncf %21 : vector<8x8xf32> to vector<8x8xbf16>
    %cst_18 = arith.constant dense<0.000000e+00> : vector<8x32xf32>
    %26 = tpu.matmul %25, %19, %cst_18 {dimension_numbers = #tpu.dot_dimension_numbers<[1], [0], [0], [1], [0, 0, 1, 1], [], []>} : vector<8x8xbf16>, vector<8x32xbf16>, vector<8x32xf32> -> vector<8x32xf32>
    %c0_19 = arith.constant 0 : index
    %c0_20 = arith.constant 0 : index
    %c0_21 = arith.constant 0 : index
    %c0_22 = arith.constant 0 : index
    %27 = vector.load %arg5[%c0_19, %c0_20, %c0_21, %c0_22] : memref<1x8x4x32xf32, #tpu.memory_space<vmem>>, vector<1x8x1x32xf32>
    %28 = vector.shape_cast %27 : vector<1x8x1x32xf32> to vector<8x32xf32>
    %29 = vector.shape_cast %26 : vector<8x32xf32> to vector<1x8x1x32xf32>
    tpu.vector_store %arg5[%c0_19, %c0_20, %c0_21, %c0_22], %29 {strides = array<i32>} : memref<1x8x4x32xf32, #tpu.memory_space<vmem>>, vector<1x8x1x32xf32>,
    %c0_23 = arith.constant 0 : index
    %c0_24 = arith.constant 0 : index
    %c1 = arith.constant 1 : index
    %c0_25 = arith.constant 0 : index
    %30 = vector.load %arg2[%c0_23, %c0_24, %c1, %c0_25] : memref<1x8x4x32xf32, #tpu.memory_space<vmem>>, vector<1x8x1x32xf32>
    %31 = vector.shape_cast %30 : vector<1x8x1x32xf32> to vector<8x32xf32>
    %cst_26 = arith.constant 0.176776692 : f32
    %32 = vector.broadcast %cst_26 : f32 to vector<8x32xf32>
    %33 = arith.mulf %31, %32 : vector<8x32xf32>
    %34 = arith.truncf %33 : vector<8x32xf32> to vector<8x32xbf16>
    %c0_27 = arith.constant 0 : index
    %c0_28 = arith.constant 0 : index
    %c1_29 = arith.constant 1 : index
    %c0_30 = arith.constant 0 : index
    %35 = vector.load %arg3[%c0_27, %c0_28, %c1_29, %c0_30] : memref<1x8x4x32xf32, #tpu.memory_space<vmem>>, vector<1x8x1x32xf32>
    %36 = vector.shape_cast %35 : vector<1x8x1x32xf32> to vector<8x32xf32>
    %37 = arith.truncf %36 : vector<8x32xf32> to vector<8x32xbf16>
    %cst_31 = arith.constant dense<0.000000e+00> : vector<8x8xf32>
    %38 = tpu.matmul %34, %37, %cst_31 {dimension_numbers = #tpu.dot_dimension_numbers<[1], [1], [0], [0], [0, 0, 1, 0], [], []>} : vector<8x32xbf16>, vector<8x32xbf16>, vector<8x8xf32> -> vector<8x8xf32>
    %cst_32 = arith.constant dense<0xFF800000> : vector<8xf32>
    %39 = vector.multi_reduction <maximumf>, %38, %cst_32 [1] : vector<8x8xf32> to vector<8xf32>
    %40 = vector.shape_cast %39 : vector<8xf32> to vector<8x1xf32>
    %41 = vector.broadcast %40 : vector<8x1xf32> to vector<8x8xf32>
    %42 = arith.subf %38, %41 : vector<8x8xf32>
    %43 = math.exp %42 : vector<8x8xf32>
    %cst_33 = arith.constant dense<0.000000e+00> : vector<8xf32>
    %44 = vector.multi_reduction <add>, %43, %cst_33 [1] : vector<8x8xf32> to vector<8xf32>
    %45 = vector.shape_cast %44 : vector<8xf32> to vector<8x1xf32>
    %46 = tpu.reciprocal %45 {approx = true} : vector<8x1xf32> -> vector<8x1xf32>
    %c0_34 = arith.constant 0 : index
    %c0_35 = arith.constant 0 : index
    %c1_36 = arith.constant 1 : index
    %c0_37 = arith.constant 0 : index
    %47 = vector.load %arg4[%c0_34, %c0_35, %c1_36, %c0_37] : memref<1x8x4x32xf32, #tpu.memory_space<vmem>>, vector<1x8x1x32xf32>
    %48 = vector.shape_cast %47 : vector<1x8x1x32xf32> to vector<8x32xf32>
    %49 = arith.truncf %48 : vector<8x32xf32> to vector<8x32xbf16>
    %50 = vector.broadcast %46 : vector<8x1xf32> to vector<8x8xf32>
    %51 = arith.mulf %43, %50 : vector<8x8xf32>
    %c0_38 = arith.constant 0 : index
    %c1_39 = arith.constant 1 : index
    %c0_40 = arith.constant 0 : index
    %c0_41 = arith.constant 0 : index
    %52 = vector.load %arg6[%c0_38, %c1_39, %c0_40, %c0_41] : memref<1x4x8x8xf32, #tpu.memory_space<vmem>>, vector<1x1x8x8xf32>
    %53 = vector.shape_cast %52 : vector<1x1x8x8xf32> to vector<8x8xf32>
    %54 = vector.shape_cast %51 : vector<8x8xf32> to vector<1x1x8x8xf32>
    tpu.vector_store %arg6[%c0_38, %c1_39, %c0_40, %c0_41], %54 {strides = array<i32>} : memref<1x4x8x8xf32, #tpu.memory_space<vmem>>, vector<1x1x8x8xf32>,
    %55 = arith.truncf %51 : vector<8x8xf32> to vector<8x8xbf16>
    %cst_42 = arith.constant dense<0.000000e+00> : vector<8x32xf32>
    %56 = tpu.matmul %55, %49, %cst_42 {dimension_numbers = #tpu.dot_dimension_numbers<[1], [0], [0], [1], [0, 0, 1, 1], [], []>} : vector<8x8xbf16>, vector<8x32xbf16>, vector<8x32xf32> -> vector<8x32xf32>
    %c0_43 = arith.constant 0 : index
    %c0_44 = arith.constant 0 : index
    %c1_45 = arith.constant 1 : index
    %c0_46 = arith.constant 0 : index
    %57 = vector.load %arg5[%c0_43, %c0_44, %c1_45, %c0_46] : memref<1x8x4x32xf32, #tpu.memory_space<vmem>>, vector<1x8x1x32xf32>
    %58 = vector.shape_cast %57 : vector<1x8x1x32xf32> to vector<8x32xf32>
    %59 = vector.shape_cast %56 : vector<8x32xf32> to vector<1x8x1x32xf32>
    tpu.vector_store %arg5[%c0_43, %c0_44, %c1_45, %c0_46], %59 {strides = array<i32>} : memref<1x8x4x32xf32, #tpu.memory_space<vmem>>, vector<1x8x1x32xf32>,
    %c0_47 = arith.constant 0 : index
    %c0_48 = arith.constant 0 : index
    %c2 = arith.constant 2 : index
    %c0_49 = arith.constant 0 : index
    %60 = vector.load %arg2[%c0_47, %c0_48, %c2, %c0_49] : memref<1x8x4x32xf32, #tpu.memory_space<vmem>>, vector<1x8x1x32xf32>
    %61 = vector.shape_cast %60 : vector<1x8x1x32xf32> to vector<8x32xf32>
    %cst_50 = arith.constant 0.176776692 : f32
    %62 = vector.broadcast %cst_50 : f32 to vector<8x32xf32>
    %63 = arith.mulf %61, %62 : vector<8x32xf32>
    %64 = arith.truncf %63 : vector<8x32xf32> to vector<8x32xbf16>
    %c0_51 = arith.constant 0 : index
    %c0_52 = arith.constant 0 : index
    %c2_53 = arith.constant 2 : index
    %c0_54 = arith.constant 0 : index
    %65 = vector.load %arg3[%c0_51, %c0_52, %c2_53, %c0_54] : memref<1x8x4x32xf32, #tpu.memory_space<vmem>>, vector<1x8x1x32xf32>
    %66 = vector.shape_cast %65 : vector<1x8x1x32xf32> to vector<8x32xf32>
    %67 = arith.truncf %66 : vector<8x32xf32> to vector<8x32xbf16>
    %cst_55 = arith.constant dense<0.000000e+00> : vector<8x8xf32>
    %68 = tpu.matmul %64, %67, %cst_55 {dimension_numbers = #tpu.dot_dimension_numbers<[1], [1], [0], [0], [0, 0, 1, 0], [], []>} : vector<8x32xbf16>, vector<8x32xbf16>, vector<8x8xf32> -> vector<8x8xf32>
    %cst_56 = arith.constant dense<0xFF800000> : vector<8xf32>
    %69 = vector.multi_reduction <maximumf>, %68, %cst_56 [1] : vector<8x8xf32> to vector<8xf32>
    %70 = vector.shape_cast %69 : vector<8xf32> to vector<8x1xf32>
    %71 = vector.broadcast %70 : vector<8x1xf32> to vector<8x8xf32>
    %72 = arith.subf %68, %71 : vector<8x8xf32>
    %73 = math.exp %72 : vector<8x8xf32>
    %cst_57 = arith.constant dense<0.000000e+00> : vector<8xf32>
    %74 = vector.multi_reduction <add>, %73, %cst_57 [1] : vector<8x8xf32> to vector<8xf32>
    %75 = vector.shape_cast %74 : vector<8xf32> to vector<8x1xf32>
    %76 = tpu.reciprocal %75 {approx = true} : vector<8x1xf32> -> vector<8x1xf32>
    %c0_58 = arith.constant 0 : index
    %c0_59 = arith.constant 0 : index
    %c2_60 = arith.constant 2 : index
    %c0_61 = arith.constant 0 : index
    %77 = vector.load %arg4[%c0_58, %c0_59, %c2_60, %c0_61] : memref<1x8x4x32xf32, #tpu.memory_space<vmem>>, vector<1x8x1x32xf32>
    %78 = vector.shape_cast %77 : vector<1x8x1x32xf32> to vector<8x32xf32>
    %79 = arith.truncf %78 : vector<8x32xf32> to vector<8x32xbf16>
    %80 = vector.broadcast %76 : vector<8x1xf32> to vector<8x8xf32>
    %81 = arith.mulf %73, %80 : vector<8x8xf32>
    %c0_62 = arith.constant 0 : index
    %c2_63 = arith.constant 2 : index
    %c0_64 = arith.constant 0 : index
    %c0_65 = arith.constant 0 : index
    %82 = vector.load %arg6[%c0_62, %c2_63, %c0_64, %c0_65] : memref<1x4x8x8xf32, #tpu.memory_space<vmem>>, vector<1x1x8x8xf32>
    %83 = vector.shape_cast %82 : vector<1x1x8x8xf32> to vector<8x8xf32>
    %84 = vector.shape_cast %81 : vector<8x8xf32> to vector<1x1x8x8xf32>
    tpu.vector_store %arg6[%c0_62, %c2_63, %c0_64, %c0_65], %84 {strides = array<i32>} : memref<1x4x8x8xf32, #tpu.memory_space<vmem>>, vector<1x1x8x8xf32>,
    %85 = arith.truncf %81 : vector<8x8xf32> to vector<8x8xbf16>
    %cst_66 = arith.constant dense<0.000000e+00> : vector<8x32xf32>
    %86 = tpu.matmul %85, %79, %cst_66 {dimension_numbers = #tpu.dot_dimension_numbers<[1], [0], [0], [1], [0, 0, 1, 1], [], []>} : vector<8x8xbf16>, vector<8x32xbf16>, vector<8x32xf32> -> vector<8x32xf32>
    %c0_67 = arith.constant 0 : index
    %c0_68 = arith.constant 0 : index
    %c2_69 = arith.constant 2 : index
    %c0_70 = arith.constant 0 : index
    %87 = vector.load %arg5[%c0_67, %c0_68, %c2_69, %c0_70] : memref<1x8x4x32xf32, #tpu.memory_space<vmem>>, vector<1x8x1x32xf32>
    %88 = vector.shape_cast %87 : vector<1x8x1x32xf32> to vector<8x32xf32>
    %89 = vector.shape_cast %86 : vector<8x32xf32> to vector<1x8x1x32xf32>
    tpu.vector_store %arg5[%c0_67, %c0_68, %c2_69, %c0_70], %89 {strides = array<i32>} : memref<1x8x4x32xf32, #tpu.memory_space<vmem>>, vector<1x8x1x32xf32>,
    %c0_71 = arith.constant 0 : index
    %c0_72 = arith.constant 0 : index
    %c3 = arith.constant 3 : index
    %c0_73 = arith.constant 0 : index
    %90 = vector.load %arg2[%c0_71, %c0_72, %c3, %c0_73] : memref<1x8x4x32xf32, #tpu.memory_space<vmem>>, vector<1x8x1x32xf32>
    %91 = vector.shape_cast %90 : vector<1x8x1x32xf32> to vector<8x32xf32>
    %cst_74 = arith.constant 0.176776692 : f32
    %92 = vector.broadcast %cst_74 : f32 to vector<8x32xf32>
    %93 = arith.mulf %91, %92 : vector<8x32xf32>
    %94 = arith.truncf %93 : vector<8x32xf32> to vector<8x32xbf16>
    %c0_75 = arith.constant 0 : index
    %c0_76 = arith.constant 0 : index
    %c3_77 = arith.constant 3 : index
    %c0_78 = arith.constant 0 : index
    %95 = vector.load %arg3[%c0_75, %c0_76, %c3_77, %c0_78] : memref<1x8x4x32xf32, #tpu.memory_space<vmem>>, vector<1x8x1x32xf32>
    %96 = vector.shape_cast %95 : vector<1x8x1x32xf32> to vector<8x32xf32>
    %97 = arith.truncf %96 : vector<8x32xf32> to vector<8x32xbf16>
    %cst_79 = arith.constant dense<0.000000e+00> : vector<8x8xf32>
    %98 = tpu.matmul %94, %97, %cst_79 {dimension_numbers = #tpu.dot_dimension_numbers<[1], [1], [0], [0], [0, 0, 1, 0], [], []>} : vector<8x32xbf16>, vector<8x32xbf16>, vector<8x8xf32> -> vector<8x8xf32>
    %cst_80 = arith.constant dense<0xFF800000> : vector<8xf32>
    %99 = vector.multi_reduction <maximumf>, %98, %cst_80 [1] : vector<8x8xf32> to vector<8xf32>
    %100 = vector.shape_cast %99 : vector<8xf32> to vector<8x1xf32>
    %101 = vector.broadcast %100 : vector<8x1xf32> to vector<8x8xf32>
    %102 = arith.subf %98, %101 : vector<8x8xf32>
    %103 = math.exp %102 : vector<8x8xf32>
    %cst_81 = arith.constant dense<0.000000e+00> : vector<8xf32>
    %104 = vector.multi_reduction <add>, %103, %cst_81 [1] : vector<8x8xf32> to vector<8xf32>
    %105 = vector.shape_cast %104 : vector<8xf32> to vector<8x1xf32>
    %106 = tpu.reciprocal %105 {approx = true} : vector<8x1xf32> -> vector<8x1xf32>
    %c0_82 = arith.constant 0 : index
    %c0_83 = arith.constant 0 : index
    %c3_84 = arith.constant 3 : index
    %c0_85 = arith.constant 0 : index
    %107 = vector.load %arg4[%c0_82, %c0_83, %c3_84, %c0_85] : memref<1x8x4x32xf32, #tpu.memory_space<vmem>>, vector<1x8x1x32xf32>
    %108 = vector.shape_cast %107 : vector<1x8x1x32xf32> to vector<8x32xf32>
    %109 = arith.truncf %108 : vector<8x32xf32> to vector<8x32xbf16>
    %110 = vector.broadcast %106 : vector<8x1xf32> to vector<8x8xf32>
    %111 = arith.mulf %103, %110 : vector<8x8xf32>
    %c0_86 = arith.constant 0 : index
    %c3_87 = arith.constant 3 : index
    %c0_88 = arith.constant 0 : index
    %c0_89 = arith.constant 0 : index
    %112 = vector.load %arg6[%c0_86, %c3_87, %c0_88, %c0_89] : memref<1x4x8x8xf32, #tpu.memory_space<vmem>>, vector<1x1x8x8xf32>
    %113 = vector.shape_cast %112 : vector<1x1x8x8xf32> to vector<8x8xf32>
    %114 = vector.shape_cast %111 : vector<8x8xf32> to vector<1x1x8x8xf32>
    tpu.vector_store %arg6[%c0_86, %c3_87, %c0_88, %c0_89], %114 {strides = array<i32>} : memref<1x4x8x8xf32, #tpu.memory_space<vmem>>, vector<1x1x8x8xf32>,
    %115 = arith.truncf %111 : vector<8x8xf32> to vector<8x8xbf16>
    %cst_90 = arith.constant dense<0.000000e+00> : vector<8x32xf32>
    %116 = tpu.matmul %115, %109, %cst_90 {dimension_numbers = #tpu.dot_dimension_numbers<[1], [0], [0], [1], [0, 0, 1, 1], [], []>} : vector<8x8xbf16>, vector<8x32xbf16>, vector<8x32xf32> -> vector<8x32xf32>
    %c0_91 = arith.constant 0 : index
    %c0_92 = arith.constant 0 : index
    %c3_93 = arith.constant 3 : index
    %c0_94 = arith.constant 0 : index
    %117 = vector.load %arg5[%c0_91, %c0_92, %c3_93, %c0_94] : memref<1x8x4x32xf32, #tpu.memory_space<vmem>>, vector<1x8x1x32xf32>
    %118 = vector.shape_cast %117 : vector<1x8x1x32xf32> to vector<8x32xf32>
    %119 = vector.shape_cast %116 : vector<8x32xf32> to vector<1x8x1x32xf32>
    tpu.vector_store %arg5[%c0_91, %c0_92, %c3_93, %c0_94], %119 {strides = array<i32>} : memref<1x8x4x32xf32, #tpu.memory_space<vmem>>, vector<1x8x1x32xf32>,
    return
  }
  func.func @transform_0(%arg0: i32, %arg1: i32) -> (i32, i32, i32, i32) {
    %c0_i32 = arith.constant 0 : i32
    %c0_i32_0 = arith.constant 0 : i32
    %c0_i32_1 = arith.constant 0 : i32
    return %arg0, %arg1, %c0_i32, %c0_i32_0 : i32, i32, i32, i32
  }
  func.func @transform_1(%arg0: i32, %arg1: i32) -> (i32, i32, i32, i32) {
    %c0_i32 = arith.constant 0 : i32
    %c0_i32_0 = arith.constant 0 : i32
    %c0_i32_1 = arith.constant 0 : i32
    %c0_i32_2 = arith.constant 0 : i32
    return %arg0, %c0_i32, %c0_i32_0, %c0_i32_1 : i32, i32, i32, i32
  }
  func.func @transform_2(%arg0: i32, %arg1: i32) -> (i32, i32, i32, i32) {
    %c0_i32 = arith.constant 0 : i32
    %c0_i32_0 = arith.constant 0 : i32
    %c0_i32_1 = arith.constant 0 : i32
    %c0_i32_2 = arith.constant 0 : i32
    return %arg0, %c0_i32, %c0_i32_0, %c0_i32_1 : i32, i32, i32, i32
  }
  func.func @transform_3(%arg0: i32, %arg1: i32) -> (i32, i32, i32, i32) {
    %c0_i32 = arith.constant 0 : i32
    %c0_i32_0 = arith.constant 0 : i32
    %c0_i32_1 = arith.constant 0 : i32
    return %arg0, %arg1, %c0_i32, %c0_i32_0 : i32, i32, i32, i32
  }
  func.func @transform_4(%arg0: i32, %arg1: i32) -> (i32, i32, i32, i32) {
    %c0_i32 = arith.constant 0 : i32
    %c0_i32_0 = arith.constant 0 : i32
    %c0_i32_1 = arith.constant 0 : i32
    return %arg0, %c0_i32, %arg1, %c0_i32_0 : i32, i32, i32, i32
  }
}

</mosaic_0001>

<llo_original>
// kernel: tpu_custom_call.1
$region0: #{tpu_custom_call.1}
  #allocation0 [shape = 'u32[]', space=smem, size = 0x4, offset = 0x4, fixed_abs, tag = 'smem constant byte address 0x4 - core index']
  #allocation1 [shape = 'u32[144,128]{1,0:T(1,128)}', space=vmem, size = 0x12000, scoped, tag = 'internal scratch']
  %s0 = inlined_call_operand.hbm [shape: f32[2,8,4,32], index: 0, kind: input, shape index: {}]
  %s1 = inlined_call_operand.hbm [shape: f32[2,8,4,32], index: 1, kind: input, shape index: {}]
  %s2 = inlined_call_operand.hbm [shape: f32[2,8,4,32], index: 2, kind: input, shape index: {}]
  %s3 = inlined_call_operand.hbm [shape: f32[2,8,4,32], index: 3, kind: output, shape index: {0}]
  %s4 = inlined_call_operand.hbm [shape: f32[2,4,8,8], index: 4, kind: output, shape index: {1}]
  %5 = xla_tuple %s3, %s4
  %s6 = sld [smem:[#allocation0]]
  $region65: #{tpu_custom_call.1} parent=0
    _
  %s8 = ssub.s32 1, %s6
  %s9 = scalar_select 0, %s8, %s6
  $region1: #{tpu_custom_call.1} parent=0
    #allocation2 [shape = 'u8[32768]{0}', space=vmem, size = 0x8000, scoped, tag = 'input window, operand 0']
    #allocation3 [shape = 's32[2]{0}', space=sflag, size = 0x8, scoped, tag = 'scoped memory for tpu_custom_call.1']
    #allocation4 [shape = 's32[2]{0}', space=sflag, size = 0x8, scoped, tag = 'scoped memory for tpu_custom_call.1']
    #allocation5 [shape = 'u8[32768]{0}', space=vmem, size = 0x8000, scoped, tag = 'input window, operand 1']
    #allocation6 [shape = 's32[2]{0}', space=sflag, size = 0x8, scoped, tag = 'scoped memory for tpu_custom_call.1']
    #allocation7 [shape = 'u8[32768]{0}', space=vmem, size = 0x8000, scoped, tag = 'input window, operand 2']
    #allocation8 [shape = 'u8[32768]{0}', space=vmem, size = 0x8000, scoped, tag = 'output window, operand 0']
    #allocation9 [shape = 'u8[32768]{0}', space=vmem, size = 0x8000, scoped, tag = 'output window, operand 1']
    #allocation10 [shape = 's32[2]{0}', space=sflag, size = 0x8, scoped, tag = 'scoped memory for tpu_custom_call.1']
    %10 = vsyncpa [#allocation3], 0
    %s11 = scalar_lea.sflag [#allocation3], 1
    %12 = vsyncpa %s11, 0
    %13 = vsyncpa [#allocation6], 0
    %s14 = scalar_lea.sflag [#allocation6], 1
    %15 = vsyncpa %s14, 0
    %16 = vsyncpa [#allocation4], 0
    %s17 = scalar_lea.sflag [#allocation4], 1
    %18 = vsyncpa %s17, 0
    %19 = vsyncpa [#allocation10], 0
    %s20 = scalar_lea.sflag [#allocation10], 1
    %21 = vsyncpa %s20, 0
    loop: start=0, step=1, limit=4
    $region2: #{tpu_custom_call.1} parent=1 // loop_pre_header
      _
    $region3: #{tpu_custom_call.1} parent=1 // loop_header
      %s23 = sphi 0, %s27
      %p24 = scmp.ge.s32.totalorder %s23, 4
      %s30 = sphi 0, %s42
      %s31 = sphi 0, %s38
      %s32 = sphi 0, %s30
      %s33 = sphi 0, %s31
      %s34 = sphi 0, %s32
      %s35 = sphi 0, %s33
      %s47 = sphi 0, %s49
      %s50 = sphi 0, %s47
      %s51 = sphi 0, %s50
      %s67 = sphi 0, %s51
      %s73 = sphi 0, %s75
      %s76 = sphi 0, %s73
      %s77 = sphi 0, %s76
      %s93 = sphi 0, %s77
      %s99 = sphi 0, %s101
      %s102 = sphi 0, %s99
      %s103 = sphi 0, %s102
      %s119 = sphi 0, %s103
      %s127 = sphi 0, %s129
      %s130 = sphi 0, %s127
      %s131 = sphi 0, %s130
      %s147 = sphi 0, %s131
      %s155 = sphi 0, %s157
      %s158 = sphi 0, %s155
      %s159 = sphi 0, %s158
      %s175 = sphi 0, %s159
    $region4: #{tpu_custom_call.1} parent=1 // loop_header_branch
      %26 = sbr.rel (%p24) target = $region8
    $region5: #{tpu_custom_call.1} parent=1 // loop_body
      %s28 = ssub.s32 %s23, 1
      %s29 = ssub.s32 %s23, 2
      %s36 = sadd.s32 1, %s31
      %p37 = scmp.ge.s32.totalorder %s36, 1
      %s38 = scalar_select %p37, 0, %s36
      %s39 = sadd.s32 1, %s30
      %s40 = scalar_select %p37, %s39, %s30
      %p41 = scmp.ge.s32.totalorder %s40, 2
      %s42 = scalar_select %p41, 0, %s40
      %s43 = ssub.s32 %s30, %s42
      %s44 = ssub.s32 %s31, %s38
      %s45 = sor.u32 %s43, %s44
      %p46 = scmp.eq.s32.totalorder %s45, 0
      %s48 = sadd.s32 %s47, 1
      %s49 = scalar_select %p46, %s47, %s48
      %p52 = pneg %p46
      %p53 = scmp.eq.s32.totalorder %s23, 1
      %p54 = por %p52, %p53
      %p55 = scmp.ne.s32.totalorder %s47, %s50
      %p56 = scmp.eq.s32.totalorder %s23, 0
      %p57 = por %p55, %p56
      %p58 = scmp.ne.s32.totalorder %s47, %s50
      %p59 = scmp.eq.s32.totalorder %s28, 1
      %p60 = por %p58, %p59
      %p61 = scmp.ne.s32.totalorder %s50, %s51
      %p62 = scmp.eq.s32.totalorder %s28, 0
      %p63 = por %p61, %p62
      %p64 = scmp.ne.s32.totalorder %s50, %s51
      %p65 = scmp.eq.s32.totalorder %s29, 1
      %p66 = por %p64, %p65
      %p68 = scmp.ne.s32.totalorder %s51, %s67
      %p69 = scmp.eq.s32.totalorder %s29, 0
      %p70 = por %p68, %p69
      %s71 = ssub.s32 %s30, %s42
      %p72 = scmp.eq.s32.totalorder %s71, 0
      %s74 = sadd.s32 %s73, 1
      %s75 = scalar_select %p72, %s73, %s74
      %p78 = pneg %p72
      %p79 = scmp.eq.s32.totalorder %s23, 1
      %p80 = por %p78, %p79
      %p81 = scmp.ne.s32.totalorder %s73, %s76
      %p82 = scmp.eq.s32.totalorder %s23, 0
      %p83 = por %p81, %p82
      %p84 = scmp.ne.s32.totalorder %s73, %s76
      %p85 = scmp.eq.s32.totalorder %s28, 1
      %p86 = por %p84, %p85
      %p87 = scmp.ne.s32.totalorder %s76, %s77
      %p88 = scmp.eq.s32.totalorder %s28, 0
      %p89 = por %p87, %p88
      %p90 = scmp.ne.s32.totalorder %s76, %s77
      %p91 = scmp.eq.s32.totalorder %s29, 1
      %p92 = por %p90, %p91
      %p94 = scmp.ne.s32.totalorder %s77, %s93
      %p95 = scmp.eq.s32.totalorder %s29, 0
      %p96 = por %p94, %p95
      %s97 = ssub.s32 %s30, %s42
      %p98 = scmp.eq.s32.totalorder %s97, 0
      %s100 = sadd.s32 %s99, 1
      %s101 = scalar_select %p98, %s99, %s100
      %p104 = pneg %p98
      %p105 = scmp.eq.s32.totalorder %s23, 1
      %p106 = por %p104, %p105
      %p107 = scmp.ne.s32.totalorder %s99, %s102
      %p108 = scmp.eq.s32.totalorder %s23, 0
      %p109 = por %p107, %p108
      %p110 = scmp.ne.s32.totalorder %s99, %s102
      %p111 = scmp.eq.s32.totalorder %s28, 1
      %p112 = por %p110, %p111
      %p113 = scmp.ne.s32.totalorder %s102, %s103
      %p114 = scmp.eq.s32.totalorder %s28, 0
      %p115 = por %p113, %p114
      %p116 = scmp.ne.s32.totalorder %s102, %s103
      %p117 = scmp.eq.s32.totalorder %s29, 1
      %p118 = por %p116, %p117
      %p120 = scmp.ne.s32.totalorder %s103, %s119
      %p121 = scmp.eq.s32.totalorder %s29, 0
      %p122 = por %p120, %p121
      %s123 = ssub.s32 %s30, %s42
      %s124 = ssub.s32 %s31, %s38
      %s125 = sor.u32 %s123, %s124
      %p126 = scmp.eq.s32.totalorder %s125, 0
      %s128 = sadd.s32 %s127, 1
      %s129 = scalar_select %p126, %s127, %s128
      %p132 = pneg %p126
      %p133 = scmp.eq.s32.totalorder %s23, 1
      %p134 = por %p132, %p133
      %p135 = scmp.ne.s32.totalorder %s127, %s130
      %p136 = scmp.eq.s32.totalorder %s23, 0
      %p137 = por %p135, %p136
      %p138 = scmp.ne.s32.totalorder %s127, %s130
      %p139 = scmp.eq.s32.totalorder %s28, 1
      %p140 = por %p138, %p139
      %p141 = scmp.ne.s32.totalorder %s130, %s131
      %p142 = scmp.eq.s32.totalorder %s28, 0
      %p143 = por %p141, %p142
      %p144 = scmp.ne.s32.totalorder %s130, %s131
      %p145 = scmp.eq.s32.totalorder %s29, 1
      %p146 = por %p144, %p145
      %p148 = scmp.ne.s32.totalorder %s131, %s147
      %p149 = scmp.eq.s32.totalorder %s29, 0
      %p150 = por %p148, %p149
      %s151 = ssub.s32 %s30, %s42
      %s152 = ssub.s32 %s31, %s38
      %s153 = sor.u32 %s151, %s152
      %p154 = scmp.eq.s32.totalorder %s153, 0
      %s156 = sadd.s32 %s155, 1
      %s157 = scalar_select %p154, %s155, %s156
      %p160 = pneg %p154
      %p161 = scmp.eq.s32.totalorder %s23, 1
      %p162 = por %p160, %p161
      %p163 = scmp.ne.s32.totalorder %s155, %s158
      %p164 = scmp.eq.s32.totalorder %s23, 0
      %p165 = por %p163, %p164
      %p166 = scmp.ne.s32.totalorder %s155, %s158
      %p167 = scmp.eq.s32.totalorder %s28, 1
      %p168 = por %p166, %p167
      %p169 = scmp.ne.s32.totalorder %s158, %s159
      %p170 = scmp.eq.s32.totalorder %s28, 0
      %p171 = por %p169, %p170
      %p172 = scmp.ne.s32.totalorder %s158, %s159
      %p173 = scmp.eq.s32.totalorder %s29, 1
      %p174 = por %p172, %p173
      %p176 = scmp.ne.s32.totalorder %s159, %s175
      %p177 = scmp.eq.s32.totalorder %s29, 0
      %p178 = por %p176, %p177
      %p179 = scmp.le.s32.totalorder 1, %s23
      %p180 = scmp.lt.s32.totalorder %s23, 3
      %p181 = pnand %p179, %p180
      %p182 = pneg %p181
      // Predicated region
      $region9: #{tpu_custom_call.1} parent=5 // pred_check
        _
      $region10: #{tpu_custom_call.1} parent=5 // pred_check_branch
        %184 = sbr.rel (%p181) target = $region12
      $region11: #{tpu_custom_call.1} parent=5 // pred_region
        %s185 = ssub.s32 %s23, 1
      $region12: #{tpu_custom_call.1} parent=5 // pred_fallthru
        _
      %p186 = scmp.lt.s32.totalorder %s23, 2
      // Predicated region
      $region13: #{tpu_custom_call.1} parent=5 // pred_check
        %p187 = pneg %p186
      $region14: #{tpu_custom_call.1} parent=5 // pred_check_branch
        %189 = sbr.rel (%p187) target = $region16
      $region15: #{tpu_custom_call.1} parent=5 // pred_region
        // Predicated region
        $region17: #{tpu_custom_call.1} parent=15 // pred_check
          %p190 = pneg %p57
        $region18: #{tpu_custom_call.1} parent=15 // pred_check_branch
          %192 = sbr.rel (%p190) target = $region20
        $region19: #{tpu_custom_call.1} parent=15 // pred_region
          %s193 = sand.u32 %s47, 1
          %s194 = scalar_lea.sflag [#allocation3], %s193
          %s195 = sand.u32 %s47, 1
          %s196 = smul.addr %s195, 32
          %s197 = scalar_lea.vmem [#allocation2], %s196
          %s198 = smul.u32 8, %s31
          %s200 = ssub.s32 512, 512
          %201 = vsyncadd %s194, %s200
          %s202 = smul.addr %s30, 8
          %s203 = sadd.s32 %s198, %s202
          %s204 = smul.addr %s203, 64
          %s205 = scalar_lea.hbm %s0, %s204
          %s206 = sshll.u32 %s197, 4
          %s207 = int_to_ptr.vmem [resolvable:$true] %s206
          %212 = dma.hbm_to_vmem [thread:$0]  %s205, 512, %s207, %s194, 64, 64, 4
        $region20: #{tpu_custom_call.1} parent=15 // pred_fallthru
          _
        // Predicated region
        $region21: #{tpu_custom_call.1} parent=15 // pred_check
          %p213 = pneg %p83
        $region22: #{tpu_custom_call.1} parent=15 // pred_check_branch
          %215 = sbr.rel (%p213) target = $region24
        $region23: #{tpu_custom_call.1} parent=15 // pred_region
          %s216 = sand.u32 %s23, 1
          %s217 = scalar_lea.sflag [#allocation6], %s216
          %s218 = sand.u32 %s73, 1
          %s219 = smul.addr %s218, 32
          %s220 = scalar_lea.vmem [#allocation5], %s219
          %s222 = ssub.s32 512, 512
          %223 = vsyncadd %s217, %s222
          %s224 = smul.addr %s30, 8
          %s225 = smul.addr %s224, 64
          %s226 = scalar_lea.hbm %s1, %s225
          %s227 = sshll.u32 %s220, 4
          %s228 = int_to_ptr.vmem [resolvable:$true] %s227
          %233 = dma.hbm_to_vmem [thread:$0]  %s226, 512, %s228, %s217, 64, 64, 4
        $region24: #{tpu_custom_call.1} parent=15 // pred_fallthru
          _
        // Predicated region
        $region25: #{tpu_custom_call.1} parent=15 // pred_check
          %p234 = pneg %p109
        $region26: #{tpu_custom_call.1} parent=15 // pred_check_branch
          %236 = sbr.rel (%p234) target = $region28
        $region27: #{tpu_custom_call.1} parent=15 // pred_region
          %s237 = sand.u32 %s23, 1
          %s238 = scalar_lea.sflag [#allocation6], %s237
          %s239 = sand.u32 %s99, 1
          %s240 = smul.addr %s239, 32
          %s241 = scalar_lea.vmem [#allocation7], %s240
          %s243 = ssub.s32 512, 512
          %244 = vsyncadd %s238, %s243
          %s245 = smul.addr %s30, 8
          %s246 = smul.addr %s245, 64
          %s247 = scalar_lea.hbm %s2, %s246
          %s248 = sshll.u32 %s241, 4
          %s249 = int_to_ptr.vmem [resolvable:$true] %s248
          %254 = dma.hbm_to_vmem [thread:$0]  %s247, 512, %s249, %s238, 64, 64, 4
        $region28: #{tpu_custom_call.1} parent=15 // pred_fallthru
          _
      $region16: #{tpu_custom_call.1} parent=5 // pred_fallthru
        _
      %p255 = scmp.le.s32.totalorder 1, %s23
      %p256 = scmp.lt.s32.totalorder %s23, 3
      %p257 = pnand %p255, %p256
      %p258 = pneg %p257
      // Predicated region
      $region29: #{tpu_custom_call.1} parent=5 // pred_check
        _
      $region30: #{tpu_custom_call.1} parent=5 // pred_check_branch
        %260 = sbr.rel (%p257) target = $region32
      $region31: #{tpu_custom_call.1} parent=5 // pred_region
        %s261 = ssub.s32 %s23, 1
        %s262 = sand.u32 %s50, 1
        %s263 = scalar_lea.sflag [#allocation3], %s262
        %s264 = sand.u32 %s50, 1
        %s265 = smul.addr %s264, 32
        %s266 = scalar_lea.vmem [#allocation2], %s265
        // Predicated region
        $region33: #{tpu_custom_call.1} parent=31 // pred_check
          %p267 = pneg %p63
        $region34: #{tpu_custom_call.1} parent=31 // pred_check_branch
          %269 = sbr.rel (%p267) target = $region36
        $region35: #{tpu_custom_call.1} parent=31 // pred_region
          %270 = dma.done %s263, 512
        $region36: #{tpu_custom_call.1} parent=31 // pred_fallthru
          _
        %s271 = sand.u32 %s28, 1
        %s272 = scalar_lea.sflag [#allocation6], %s271
        %s273 = sand.u32 %s76, 1
        %s274 = smul.addr %s273, 32
        %s275 = scalar_lea.vmem [#allocation5], %s274
        // Predicated region
        $region37: #{tpu_custom_call.1} parent=31 // pred_check
          %p276 = pneg %p89
        $region38: #{tpu_custom_call.1} parent=31 // pred_check_branch
          %278 = sbr.rel (%p276) target = $region40
        $region39: #{tpu_custom_call.1} parent=31 // pred_region
          %279 = dma.done %s272, 512
        $region40: #{tpu_custom_call.1} parent=31 // pred_fallthru
          _
        %s280 = sand.u32 %s28, 1
        %s281 = scalar_lea.sflag [#allocation6], %s280
        %s282 = sand.u32 %s102, 1
        %s283 = smul.addr %s282, 32
        %s284 = scalar_lea.vmem [#allocation7], %s283
        // Predicated region
        $region41: #{tpu_custom_call.1} parent=31 // pred_check
          %p285 = pneg %p115
        $region42: #{tpu_custom_call.1} parent=31 // pred_check_branch
          %287 = sbr.rel (%p285) target = $region44
        $region43: #{tpu_custom_call.1} parent=31 // pred_region
          %288 = dma.done %s281, 512
        $region44: #{tpu_custom_call.1} parent=31 // pred_fallthru
          _
        %s289 = sand.u32 %s50, 1
        %s290 = scalar_lea.sflag [#allocation3], %s289
        %s291 = sand.u32 %s50, 1
        %s292 = smul.addr %s291, 32
        %s293 = scalar_lea.vmem [#allocation2], %s292
        %p294 = pneg %p63
        %p295 = pneg %p60
        %s296 = sand.u32 %s28, 1
        %s297 = scalar_lea.sflag [#allocation6], %s296
        %s298 = sand.u32 %s76, 1
        %s299 = smul.addr %s298, 32
        %s300 = scalar_lea.vmem [#allocation5], %s299
        %p301 = pneg %p89
        %p302 = pneg %p86
        %s303 = sand.u32 %s28, 1
        %s304 = scalar_lea.sflag [#allocation6], %s303
        %s305 = sand.u32 %s102, 1
        %s306 = smul.addr %s305, 32
        %s307 = scalar_lea.vmem [#allocation7], %s306
        %p308 = pneg %p115
        %p309 = pneg %p112
        %p310 = pneg %p143
        %p311 = pneg %p140
        %s312 = sand.u32 %s130, 1
        %s313 = scalar_lea.sflag [#allocation4], %s312
        %s314 = sand.u32 %s130, 1
        %s315 = smul.addr %s314, 32
        %s316 = scalar_lea.vmem [#allocation8], %s315
        %p317 = pneg %p171
        %p318 = pneg %p168
        %s319 = sand.u32 %s158, 1
        %s320 = scalar_lea.sflag [#allocation10], %s319
        %s321 = sand.u32 %s158, 1
        %s322 = smul.addr %s321, 32
        %s323 = scalar_lea.vmem [#allocation9], %s322
        %s324 = smul.u32 8, %s33
        %s325 = smul.u32 8, %s33
        %v327 = vld [vmem:[%s266] sm:$0x1]
        %v328 = vld [vmem:[%s266 + $0x4] sm:$0x1]
        %v329 = vld [vmem:[%s266 + $0x8] sm:$0x1]
        %v330 = vld [vmem:[%s266 + $0xc] sm:$0x1]
        %v331 = vld [vmem:[%s266 + $0x10] sm:$0x1]
        %v332 = vld [vmem:[%s266 + $0x14] sm:$0x1]
        %v333 = vld [vmem:[%s266 + $0x18] sm:$0x1]
        %v334 = vld [vmem:[%s266 + $0x1c] sm:$0x1]
        %v335 = vmul.f32 %v327, 0.17677669
        %v336 = vmul.f32 %v328, 0.17677669
        %v337 = vmul.f32 %v329, 0.17677669
        %v338 = vmul.f32 %v330, 0.17677669
        %v339 = vmul.f32 %v331, 0.17677669
        %v340 = vmul.f32 %v332, 0.17677669
        %v341 = vmul.f32 %v333, 0.17677669
        %v342 = vmul.f32 %v334, 0.17677669
        %v343 = vpack.c.bf16 %v335, %v335
        %v344 = vpack.c.bf16 %v336, %v336
        %v345 = vpack.c.bf16 %v337, %v337
        %v346 = vpack.c.bf16 %v338, %v338
        %v347 = vpack.c.bf16 %v339, %v339
        %v348 = vpack.c.bf16 %v340, %v340
        %v349 = vpack.c.bf16 %v341, %v341
        %v350 = vpack.c.bf16 %v342, %v342
        %v351 = vld [vmem:[%s275] sm:$0x1]
        %v352 = vld [vmem:[%s275 + $0x4] sm:$0x1]
        %v353 = vld [vmem:[%s275 + $0x8] sm:$0x1]
        %v354 = vld [vmem:[%s275 + $0xc] sm:$0x1]
        %v355 = vld [vmem:[%s275 + $0x10] sm:$0x1]
        %v356 = vld [vmem:[%s275 + $0x14] sm:$0x1]
        %v357 = vld [vmem:[%s275 + $0x18] sm:$0x1]
        %v358 = vld [vmem:[%s275 + $0x1c] sm:$0x1]
        %v359 = vpack.c.bf16 %v351, %v351
        %v360 = vpack.c.bf16 %v352, %v352
        %v361 = vpack.c.bf16 %v353, %v353
        %v362 = vpack.c.bf16 %v354, %v354
        %v363 = vpack.c.bf16 %v355, %v355
        %v364 = vpack.c.bf16 %v356, %v356
        %v365 = vpack.c.bf16 %v357, %v357
        %v366 = vpack.c.bf16 %v358, %v358
        %v375 = vunpack.c.l.b16 %v343
        %v376 = vunpack.c.l.b16 %v344
        %v377 = vunpack.c.l.b16 %v345
        %v378 = vunpack.c.l.b16 %v346
        %v379 = vunpack.c.l.b16 %v347
        %v380 = vunpack.c.l.b16 %v348
        %v381 = vunpack.c.l.b16 %v349
        %v382 = vunpack.c.l.b16 %v350
        %v383 = vrot.slane %v376, 7
        %vm384 = vcmask 1041409
        %v385 = vsel %vm384, %v383, %v375
        %v386 = vrot.slane %v377, 6
        %vm387 = vcmask 1042434
        %v388 = vsel %vm387, %v386, %v385
        %v389 = vrot.slane %v378, 5
        %vm390 = vcmask 1043459
        %v391 = vsel %vm390, %v389, %v388
        %v392 = vrot.slane %v379, 4
        %vm393 = vcmask 1044484
        %v394 = vsel %vm393, %v392, %v391
        %v395 = vrot.slane %v380, 3
        %vm396 = vcmask 1045509
        %v397 = vsel %vm396, %v395, %v394
        %v398 = vrot.slane %v381, 2
        %vm399 = vcmask 1046534
        %v400 = vsel %vm399, %v398, %v397
        %v401 = vrot.slane %v382, 1
        %vm402 = vcmask 1047559
        %v403 = vsel %vm402, %v401, %v400
        %v404 = vpack.c.b16 %v403, %v403
        %v413 = vunpack.c.l.b16 %v359
        %v414 = vunpack.c.l.b16 %v360
        %v415 = vunpack.c.l.b16 %v361
        %v416 = vunpack.c.l.b16 %v362
        %v417 = vunpack.c.l.b16 %v363
        %v418 = vunpack.c.l.b16 %v364
        %v419 = vunpack.c.l.b16 %v365
        %v420 = vunpack.c.l.b16 %v366
        %v421 = vrot.slane %v414, 7
        %v422 = vsel %vm384, %v421, %v413
        %v423 = vrot.slane %v415, 6
        %v424 = vsel %vm387, %v423, %v422
        %v425 = vrot.slane %v416, 5
        %v426 = vsel %vm390, %v425, %v424
        %v427 = vrot.slane %v417, 4
        %v428 = vsel %vm393, %v427, %v426
        %v429 = vrot.slane %v418, 3
        %v430 = vsel %vm396, %v429, %v428
        %v431 = vrot.slane %v419, 2
        %v432 = vsel %vm399, %v431, %v430
        %v433 = vrot.slane %v420, 1
        %v434 = vsel %vm402, %v433, %v432
        %v435 = vpack.c.b16 %v434, %v434
        %vm436 = vcmask 261120
        %v438 = vsel %vm436, %v404, 0
        %v441 = vsel %vm436, %v435, 0
        %443 = vmatprep.subr.bf16.mxu0 0
        %444 = vmatpush1.bf16.xpose.msra.mxu0 %v441
        %445 = vmatprep.subr.bf16.mxu0 0
        %446 = vmatpush1.bf16.xpose.msra.mxu0 0
        %447 = vmatprep.subr.bf16.mxu0 0
        %448 = vmatpush1.bf16.xpose.msra.mxu0 0
        %449 = vmatprep.subr.bf16.mxu0 0
        %450 = vmatpush1.bf16.xpose.msra.mxu0 0
        %451 = vmatprep.subr.bf16.mxu0 0
        %452 = vmatpush1.bf16.xpose.msra.mxu0 0
        %453 = vmatprep.subr.bf16.mxu0 0
        %454 = vmatpush1.bf16.xpose.msra.mxu0 0
        %455 = vmatprep.subr.bf16.mxu0 0
        %456 = vmatpush1.bf16.xpose.msra.mxu0 0
        %457 = vmatprep.subr.bf16.mxu0 0
        %458 = vmatpush1.bf16.xpose.msra.mxu0 0
        %459 = vmatprep.subr.bf16.mxu0 0
        %460 = vmatpush1.bf16.xpose.msra.mxu0 0
        %461 = vmatprep.subr.bf16.mxu0 0
        %462 = vmatpush1.bf16.xpose.msra.mxu0 0
        %463 = vmatprep.subr.bf16.mxu0 0
        %464 = vmatpush1.bf16.xpose.msra.mxu0 0
        %465 = vmatprep.subr.bf16.mxu0 0
        %466 = vmatpush1.bf16.xpose.msra.mxu0 0
        %467 = vmatprep.subr.bf16.mxu0 0
        %468 = vmatpush1.bf16.xpose.msra.mxu0 0
        %469 = vmatprep.subr.bf16.mxu0 0
        %470 = vmatpush1.bf16.xpose.msra.mxu0 0
        %471 = vmatprep.subr.bf16.mxu0 0
        %472 = vmatpush1.bf16.xpose.msra.mxu0 0
        %473 = vmatprep.subr.bf16.mxu0 0
        %474 = vmatpush1.bf16.xpose.msra.mxu0 0
        %475 = vmatprep.mubr.bf16.mxu0 0
        %476 = vmatmul.mubr.bf16.gmra.mrb[0].mxu0 %v438
        %v477 = vpop.f32.mrb[0].mxu0
        %v478 = vadd.f32 0.0, %v477
        %v479 = vpop.f32.mrb[0].mxu0
        %v480 = vpop.f32.mrb[0].mxu0
        %v481 = vpop.f32.mrb[0].mxu0
        %482 = vdwg.mxu0
        %vm483 = vcmask 64512
        %v484 = vsel %vm483, %v478, -inf
        %485 = vmax.xlane.f32.xlu0 %v484
        %v486 = vpop.xlane.xlu0 %485
        %v487 = vsub.f32 %v478, %v486
        %v488 = vmul.f32 %v487, 1.442695
        %v489 = vpow.pop %v488
        %v490 = vsel %vm483, %v489, 0.0
        %491 = vadd.xlane.f32.xlu0 %v490
        %v492 = vpop.xlane.xlu0 %491
        %v493 = vrcp.pop %v492
        %v494 = vld [vmem:[%s284] sm:$0x1]
        %v495 = vld [vmem:[%s284 + $0x4] sm:$0x1]
        %v496 = vld [vmem:[%s284 + $0x8] sm:$0x1]
        %v497 = vld [vmem:[%s284 + $0xc] sm:$0x1]
        %v498 = vld [vmem:[%s284 + $0x10] sm:$0x1]
        %v499 = vld [vmem:[%s284 + $0x14] sm:$0x1]
        %v500 = vld [vmem:[%s284 + $0x18] sm:$0x1]
        %v501 = vld [vmem:[%s284 + $0x1c] sm:$0x1]
        %v502 = vpack.c.bf16 %v494, %v494
        %v503 = vpack.c.bf16 %v495, %v495
        %v504 = vpack.c.bf16 %v496, %v496
        %v505 = vpack.c.bf16 %v497, %v497
        %v506 = vpack.c.bf16 %v498, %v498
        %v507 = vpack.c.bf16 %v499, %v499
        %v508 = vpack.c.bf16 %v500, %v500
        %v509 = vpack.c.bf16 %v501, %v501
        %v510 = vmul.f32 %v489, %v493
        %511 = vst.msk [vmem:[%s323] sm:$0xff] %vm483, %v510
        %v512 = vpack.c.bf16 %v510, %v510
        %v521 = vunpack.c.l.b16 %v502
        %v522 = vunpack.c.l.b16 %v503
        %v523 = vunpack.c.l.b16 %v504
        %v524 = vunpack.c.l.b16 %v505
        %v525 = vunpack.c.l.b16 %v506
        %v526 = vunpack.c.l.b16 %v507
        %v527 = vunpack.c.l.b16 %v508
        %v528 = vunpack.c.l.b16 %v509
        %v529 = vrot.slane %v522, 7
        %v530 = vsel %vm384, %v529, %v521
        %v531 = vrot.slane %v523, 6
        %v532 = vsel %vm387, %v531, %v530
        %v533 = vrot.slane %v524, 5
        %v534 = vsel %vm390, %v533, %v532
        %v535 = vrot.slane %v525, 4
        %v536 = vsel %vm393, %v535, %v534
        %v537 = vrot.slane %v526, 3
        %v538 = vsel %vm396, %v537, %v536
        %v539 = vrot.slane %v527, 2
        %v540 = vsel %vm399, %v539, %v538
        %v541 = vrot.slane %v528, 1
        %v542 = vsel %vm402, %v541, %v540
        %v543 = vpack.c.b16 %v542, %v542
        %v545 = vsel %vm483, %v512, 0
        %vm547 = vcmask 1043456
        %v549 = vsel %vm547, %v543, 0
        %551 = vmatprep.subr.bf16.mxu0 0
        %552 = vmatpush1.bf16.msra.mxu0 %v549
        %553 = vmatprep.subr.bf16.mxu0 0
        %554 = vmatpush1.bf16.msra.mxu0 0
        %555 = vmatprep.subr.bf16.mxu0 0
        %556 = vmatpush1.bf16.msra.mxu0 0
        %557 = vmatprep.subr.bf16.mxu0 0
        %558 = vmatpush1.bf16.msra.mxu0 0
        %559 = vmatprep.subr.bf16.mxu0 0
        %560 = vmatpush1.bf16.msra.mxu0 0
        %561 = vmatprep.subr.bf16.mxu0 0
        %562 = vmatpush1.bf16.msra.mxu0 0
        %563 = vmatprep.subr.bf16.mxu0 0
        %564 = vmatpush1.bf16.msra.mxu0 0
        %565 = vmatprep.subr.bf16.mxu0 0
        %566 = vmatpush1.bf16.msra.mxu0 0
        %567 = vmatprep.subr.bf16.mxu0 0
        %568 = vmatpush1.bf16.msra.mxu0 0
        %569 = vmatprep.subr.bf16.mxu0 0
        %570 = vmatpush1.bf16.msra.mxu0 0
        %571 = vmatprep.subr.bf16.mxu0 0
        %572 = vmatpush1.bf16.msra.mxu0 0
        %573 = vmatprep.subr.bf16.mxu0 0
        %574 = vmatpush1.bf16.msra.mxu0 0
        %575 = vmatprep.subr.bf16.mxu0 0
        %576 = vmatpush1.bf16.msra.mxu0 0
        %577 = vmatprep.subr.bf16.mxu0 0
        %578 = vmatpush1.bf16.msra.mxu0 0
        %579 = vmatprep.subr.bf16.mxu0 0
        %580 = vmatpush1.bf16.msra.mxu0 0
        %581 = vmatprep.subr.bf16.mxu0 0
        %582 = vmatpush1.bf16.msra.mxu0 0
        %583 = vmatprep.mubr.bf16.mxu0 0
        %584 = vmatmul.mubr.bf16.gmra.mrb[0].mxu0 %v545
        %v585 = vpop.f32.mrb[0].mxu0
        %v586 = vadd.f32 0.0, %v585
        %v587 = vpop.f32.mrb[0].mxu0
        %v588 = vpop.f32.mrb[0].mxu0
        %v589 = vpop.f32.mrb[0].mxu0
        %590 = vdwg.mxu0
        %v592 = vcombine.high %v586, %v586
        %v594 = vunpack.c.l.s4 1966171168
        %v595 = vunpack.c.0.s8 %v594
        %v596 = vlaneseq
        %v597 = vshrl.u32 %v596, 7
        %v598 = vsub.s32 %v595, %v597
        %v599 = vrot.slane %v586, %v598
        %v601 = vunpack.c.l.s4 1966171168
        %v602 = vunpack.c.0.s8 %v601
        %v603 = vlaneseq
        %v604 = vshrl.u32 %v603, 7
        %v605 = vsub.s32 %v602, %v604
        %v606 = vrot.slane %v592, %v605
        %v607 = vcombine.high %v599, %v599
        %v608 = vcombine.high %v606, %v606
        %v610 = vunpack.c.l.s4 1966171168
        %v611 = vunpack.c.0.s8 %v610
        %v612 = vlaneseq
        %v613 = vshrl.u32 %v612, 7
        %v614 = vsub.s32 %v611, %v613
        %v615 = vrot.slane %v599, %v614
        %v617 = vunpack.c.l.s4 1966171168
        %v618 = vunpack.c.0.s8 %v617
        %v619 = vlaneseq
        %v620 = vshrl.u32 %v619, 7
        %v621 = vsub.s32 %v618, %v620
        %v622 = vrot.slane %v606, %v621
        %v624 = vunpack.c.l.s4 1966171168
        %v625 = vunpack.c.0.s8 %v624
        %v626 = vlaneseq
        %v627 = vshrl.u32 %v626, 7
        %v628 = vsub.s32 %v625, %v627
        %v629 = vrot.slane %v607, %v628
        %v631 = vunpack.c.l.s4 1966171168
        %v632 = vunpack.c.0.s8 %v631
        %v633 = vlaneseq
        %v634 = vshrl.u32 %v633, 7
        %v635 = vsub.s32 %v632, %v634
        %v636 = vrot.slane %v608, %v635
        %v637 = vcombine.high %v615, %v615
        %v638 = vcombine.high %v622, %v622
        %v639 = vcombine.high %v629, %v629
        %v640 = vcombine.high %v636, %v636
        %vm649 = vcmask 253952
        %650 = vst.msk [vmem:[%s316] sm:$0x1] %vm649, %v615
        %651 = vst.msk [vmem:[%s316 + $0x4] sm:$0x1] %vm649, %v629
        %652 = vst.msk [vmem:[%s316 + $0x8] sm:$0x1] %vm649, %v637
        %653 = vst.msk [vmem:[%s316 + $0xc] sm:$0x1] %vm649, %v639
        %654 = vst.msk [vmem:[%s316 + $0x10] sm:$0x1] %vm649, %v622
        %655 = vst.msk [vmem:[%s316 + $0x14] sm:$0x1] %vm649, %v636
        %656 = vst.msk [vmem:[%s316 + $0x18] sm:$0x1] %vm649, %v638
        %657 = vst.msk [vmem:[%s316 + $0x1c] sm:$0x1] %vm649, %v640
        %v658 = vld [vmem:[%s266 + $0x1] sm:$0x1]
        %v659 = vld [vmem:[%s266 + $0x5] sm:$0x1]
        %v660 = vld [vmem:[%s266 + $0x9] sm:$0x1]
        %v661 = vld [vmem:[%s266 + $0xd] sm:$0x1]
        %v662 = vld [vmem:[%s266 + $0x11] sm:$0x1]
        %v663 = vld [vmem:[%s266 + $0x15] sm:$0x1]
        %v664 = vld [vmem:[%s266 + $0x19] sm:$0x1]
        %v665 = vld [vmem:[%s266 + $0x1d] sm:$0x1]
        %v666 = vmul.f32 %v658, 0.17677669
        %v667 = vmul.f32 %v659, 0.17677669
        %v668 = vmul.f32 %v660, 0.17677669
        %v669 = vmul.f32 %v661, 0.17677669
        %v670 = vmul.f32 %v662, 0.17677669
        %v671 = vmul.f32 %v663, 0.17677669
        %v672 = vmul.f32 %v664, 0.17677669
        %v673 = vmul.f32 %v665, 0.17677669
        %v674 = vpack.c.bf16 %v666, %v666
        %v675 = vpack.c.bf16 %v667, %v667
        %v676 = vpack.c.bf16 %v668, %v668
        %v677 = vpack.c.bf16 %v669, %v669
        %v678 = vpack.c.bf16 %v670, %v670
        %v679 = vpack.c.bf16 %v671, %v671
        %v680 = vpack.c.bf16 %v672, %v672
        %v681 = vpack.c.bf16 %v673, %v673
        %v682 = vld [vmem:[%s275 + $0x1] sm:$0x1]
        %v683 = vld [vmem:[%s275 + $0x5] sm:$0x1]
        %v684 = vld [vmem:[%s275 + $0x9] sm:$0x1]
        %v685 = vld [vmem:[%s275 + $0xd] sm:$0x1]
        %v686 = vld [vmem:[%s275 + $0x11] sm:$0x1]
        %v687 = vld [vmem:[%s275 + $0x15] sm:$0x1]
        %v688 = vld [vmem:[%s275 + $0x19] sm:$0x1]
        %v689 = vld [vmem:[%s275 + $0x1d] sm:$0x1]
        %v690 = vpack.c.bf16 %v682, %v682
        %v691 = vpack.c.bf16 %v683, %v683
        %v692 = vpack.c.bf16 %v684, %v684
        %v693 = vpack.c.bf16 %v685, %v685
        %v694 = vpack.c.bf16 %v686, %v686
        %v695 = vpack.c.bf16 %v687, %v687
        %v696 = vpack.c.bf16 %v688, %v688
        %v697 = vpack.c.bf16 %v689, %v689
        %v706 = vunpack.c.l.b16 %v674
        %v707 = vunpack.c.l.b16 %v675
        %v708 = vunpack.c.l.b16 %v676
        %v709 = vunpack.c.l.b16 %v677
        %v710 = vunpack.c.l.b16 %v678
        %v711 = vunpack.c.l.b16 %v679
        %v712 = vunpack.c.l.b16 %v680
        %v713 = vunpack.c.l.b16 %v681
        %v714 = vrot.slane %v707, 7
        %v715 = vsel %vm384, %v714, %v706
        %v716 = vrot.slane %v708, 6
        %v717 = vsel %vm387, %v716, %v715
        %v718 = vrot.slane %v709, 5
        %v719 = vsel %vm390, %v718, %v717
        %v720 = vrot.slane %v710, 4
        %v721 = vsel %vm393, %v720, %v719
        %v722 = vrot.slane %v711, 3
        %v723 = vsel %vm396, %v722, %v721
        %v724 = vrot.slane %v712, 2
        %v725 = vsel %vm399, %v724, %v723
        %v726 = vrot.slane %v713, 1
        %v727 = vsel %vm402, %v726, %v725
        %v728 = vpack.c.b16 %v727, %v727
        %v737 = vunpack.c.l.b16 %v690
        %v738 = vunpack.c.l.b16 %v691
        %v739 = vunpack.c.l.b16 %v692
        %v740 = vunpack.c.l.b16 %v693
        %v741 = vunpack.c.l.b16 %v694
        %v742 = vunpack.c.l.b16 %v695
        %v743 = vunpack.c.l.b16 %v696
        %v744 = vunpack.c.l.b16 %v697
        %v745 = vrot.slane %v738, 7
        %v746 = vsel %vm384, %v745, %v737
        %v747 = vrot.slane %v739, 6
        %v748 = vsel %vm387, %v747, %v746
        %v749 = vrot.slane %v740, 5
        %v750 = vsel %vm390, %v749, %v748
        %v751 = vrot.slane %v741, 4
        %v752 = vsel %vm393, %v751, %v750
        %v753 = vrot.slane %v742, 3
        %v754 = vsel %vm396, %v753, %v752
        %v755 = vrot.slane %v743, 2
        %v756 = vsel %vm399, %v755, %v754
        %v757 = vrot.slane %v744, 1
        %v758 = vsel %vm402, %v757, %v756
        %v759 = vpack.c.b16 %v758, %v758
        %v761 = vsel %vm436, %v728, 0
        %v764 = vsel %vm436, %v759, 0
        %766 = vmatprep.subr.bf16.mxu0 0
        %767 = vmatpush1.bf16.xpose.msra.mxu0 %v764
        %768 = vmatprep.subr.bf16.mxu0 0
        %769 = vmatpush1.bf16.xpose.msra.mxu0 0
        %770 = vmatprep.subr.bf16.mxu0 0
        %771 = vmatpush1.bf16.xpose.msra.mxu0 0
        %772 = vmatprep.subr.bf16.mxu0 0
        %773 = vmatpush1.bf16.xpose.msra.mxu0 0
        %774 = vmatprep.subr.bf16.mxu0 0
        %775 = vmatpush1.bf16.xpose.msra.mxu0 0
        %776 = vmatprep.subr.bf16.mxu0 0
        %777 = vmatpush1.bf16.xpose.msra.mxu0 0
        %778 = vmatprep.subr.bf16.mxu0 0
        %779 = vmatpush1.bf16.xpose.msra.mxu0 0
        %780 = vmatprep.subr.bf16.mxu0 0
        %781 = vmatpush1.bf16.xpose.msra.mxu0 0
        %782 = vmatprep.subr.bf16.mxu0 0
        %783 = vmatpush1.bf16.xpose.msra.mxu0 0
        %784 = vmatprep.subr.bf16.mxu0 0
        %785 = vmatpush1.bf16.xpose.msra.mxu0 0
        %786 = vmatprep.subr.bf16.mxu0 0
        %787 = vmatpush1.bf16.xpose.msra.mxu0 0
        %788 = vmatprep.subr.bf16.mxu0 0
        %789 = vmatpush1.bf16.xpose.msra.mxu0 0
        %790 = vmatprep.subr.bf16.mxu0 0
        %791 = vmatpush1.bf16.xpose.msra.mxu0 0
        %792 = vmatprep.subr.bf16.mxu0 0
        %793 = vmatpush1.bf16.xpose.msra.mxu0 0
        %794 = vmatprep.subr.bf16.mxu0 0
        %795 = vmatpush1.bf16.xpose.msra.mxu0 0
        %796 = vmatprep.subr.bf16.mxu0 0
        %797 = vmatpush1.bf16.xpose.msra.mxu0 0
        %798 = vmatprep.mubr.bf16.mxu0 0
        %799 = vmatmul.mubr.bf16.gmra.mrb[0].mxu0 %v761
        %v800 = vpop.f32.mrb[0].mxu0
        %v801 = vadd.f32 0.0, %v800
        %v802 = vpop.f32.mrb[0].mxu0
        %v803 = vpop.f32.mrb[0].mxu0
        %v804 = vpop.f32.mrb[0].mxu0
        %805 = vdwg.mxu0
        %v806 = vsel %vm483, %v801, -inf
        %807 = vmax.xlane.f32.xlu0 %v806
        %v808 = vpop.xlane.xlu0 %807
        %v809 = vsub.f32 %v801, %v808
        %v810 = vmul.f32 %v809, 1.442695
        %v811 = vpow.pop %v810
        %v812 = vsel %vm483, %v811, 0.0
        %813 = vadd.xlane.f32.xlu0 %v812
        %v814 = vpop.xlane.xlu0 %813
        %v815 = vrcp.pop %v814
        %v816 = vld [vmem:[%s284 + $0x1] sm:$0x1]
        %v817 = vld [vmem:[%s284 + $0x5] sm:$0x1]
        %v818 = vld [vmem:[%s284 + $0x9] sm:$0x1]
        %v819 = vld [vmem:[%s284 + $0xd] sm:$0x1]
        %v820 = vld [vmem:[%s284 + $0x11] sm:$0x1]
        %v821 = vld [vmem:[%s284 + $0x15] sm:$0x1]
        %v822 = vld [vmem:[%s284 + $0x19] sm:$0x1]
        %v823 = vld [vmem:[%s284 + $0x1d] sm:$0x1]
        %v824 = vpack.c.bf16 %v816, %v816
        %v825 = vpack.c.bf16 %v817, %v817
        %v826 = vpack.c.bf16 %v818, %v818
        %v827 = vpack.c.bf16 %v819, %v819
        %v828 = vpack.c.bf16 %v820, %v820
        %v829 = vpack.c.bf16 %v821, %v821
        %v830 = vpack.c.bf16 %v822, %v822
        %v831 = vpack.c.bf16 %v823, %v823
        %v832 = vmul.f32 %v811, %v815
        %s833 = scalar_lea.vmem %s323, 8 [#allocation9]
        %834 = vst.msk [vmem:[%s833] sm:$0xff] %vm483, %v832
        %v835 = vpack.c.bf16 %v832, %v832
        %v844 = vunpack.c.l.b16 %v824
        %v845 = vunpack.c.l.b16 %v825
        %v846 = vunpack.c.l.b16 %v826
        %v847 = vunpack.c.l.b16 %v827
        %v848 = vunpack.c.l.b16 %v828
        %v849 = vunpack.c.l.b16 %v829
        %v850 = vunpack.c.l.b16 %v830
        %v851 = vunpack.c.l.b16 %v831
        %v852 = vrot.slane %v845, 7
        %v853 = vsel %vm384, %v852, %v844
        %v854 = vrot.slane %v846, 6
        %v855 = vsel %vm387, %v854, %v853
        %v856 = vrot.slane %v847, 5
        %v857 = vsel %vm390, %v856, %v855
        %v858 = vrot.slane %v848, 4
        %v859 = vsel %vm393, %v858, %v857
        %v860 = vrot.slane %v849, 3
        %v861 = vsel %vm396, %v860, %v859
        %v862 = vrot.slane %v850, 2
        %v863 = vsel %vm399, %v862, %v861
        %v864 = vrot.slane %v851, 1
        %v865 = vsel %vm402, %v864, %v863
        %v866 = vpack.c.b16 %v865, %v865
        %v868 = vsel %vm483, %v835, 0
        %v871 = vsel %vm547, %v866, 0
        %873 = vmatprep.subr.bf16.mxu0 0
        %874 = vmatpush1.bf16.msra.mxu0 %v871
        %875 = vmatprep.subr.bf16.mxu0 0
        %876 = vmatpush1.bf16.msra.mxu0 0
        %877 = vmatprep.subr.bf16.mxu0 0
        %878 = vmatpush1.bf16.msra.mxu0 0
        %879 = vmatprep.subr.bf16.mxu0 0
        %880 = vmatpush1.bf16.msra.mxu0 0
        %881 = vmatprep.subr.bf16.mxu0 0
        %882 = vmatpush1.bf16.msra.mxu0 0
        %883 = vmatprep.subr.bf16.mxu0 0
        %884 = vmatpush1.bf16.msra.mxu0 0
        %885 = vmatprep.subr.bf16.mxu0 0
        %886 = vmatpush1.bf16.msra.mxu0 0
        %887 = vmatprep.subr.bf16.mxu0 0
        %888 = vmatpush1.bf16.msra.mxu0 0
        %889 = vmatprep.subr.bf16.mxu0 0
        %890 = vmatpush1.bf16.msra.mxu0 0
        %891 = vmatprep.subr.bf16.mxu0 0
        %892 = vmatpush1.bf16.msra.mxu0 0
        %893 = vmatprep.subr.bf16.mxu0 0
        %894 = vmatpush1.bf16.msra.mxu0 0
        %895 = vmatprep.subr.bf16.mxu0 0
        %896 = vmatpush1.bf16.msra.mxu0 0
        %897 = vmatprep.subr.bf16.mxu0 0
        %898 = vmatpush1.bf16.msra.mxu0 0
        %899 = vmatprep.subr.bf16.mxu0 0
        %900 = vmatpush1.bf16.msra.mxu0 0
        %901 = vmatprep.subr.bf16.mxu0 0
        %902 = vmatpush1.bf16.msra.mxu0 0
        %903 = vmatprep.subr.bf16.mxu0 0
        %904 = vmatpush1.bf16.msra.mxu0 0
        %905 = vmatprep.mubr.bf16.mxu0 0
        %906 = vmatmul.mubr.bf16.gmra.mrb[0].mxu0 %v868
        %v907 = vpop.f32.mrb[0].mxu0
        %v908 = vadd.f32 0.0, %v907
        %v909 = vpop.f32.mrb[0].mxu0
        %v910 = vpop.f32.mrb[0].mxu0
        %v911 = vpop.f32.mrb[0].mxu0
        %912 = vdwg.mxu0
        %v914 = vcombine.high %v908, %v908
        %v916 = vunpack.c.l.s4 1966171168
        %v917 = vunpack.c.0.s8 %v916
        %v918 = vlaneseq
        %v919 = vshrl.u32 %v918, 7
        %v920 = vsub.s32 %v917, %v919
        %v921 = vrot.slane %v908, %v920
        %v923 = vunpack.c.l.s4 1966171168
        %v924 = vunpack.c.0.s8 %v923
        %v925 = vlaneseq
        %v926 = vshrl.u32 %v925, 7
        %v927 = vsub.s32 %v924, %v926
        %v928 = vrot.slane %v914, %v927
        %v929 = vcombine.high %v921, %v921
        %v930 = vcombine.high %v928, %v928
        %v932 = vunpack.c.l.s4 1966171168
        %v933 = vunpack.c.0.s8 %v932
        %v934 = vlaneseq
        %v935 = vshrl.u32 %v934, 7
        %v936 = vsub.s32 %v933, %v935
        %v937 = vrot.slane %v921, %v936
        %v939 = vunpack.c.l.s4 1966171168
        %v940 = vunpack.c.0.s8 %v939
        %v941 = vlaneseq
        %v942 = vshrl.u32 %v941, 7
        %v943 = vsub.s32 %v940, %v942
        %v944 = vrot.slane %v928, %v943
        %v946 = vunpack.c.l.s4 1966171168
        %v947 = vunpack.c.0.s8 %v946
        %v948 = vlaneseq
        %v949 = vshrl.u32 %v948, 7
        %v950 = vsub.s32 %v947, %v949
        %v951 = vrot.slane %v929, %v950
        %v953 = vunpack.c.l.s4 1966171168
        %v954 = vunpack.c.0.s8 %v953
        %v955 = vlaneseq
        %v956 = vshrl.u32 %v955, 7
        %v957 = vsub.s32 %v954, %v956
        %v958 = vrot.slane %v930, %v957
        %v959 = vcombine.high %v937, %v937
        %v960 = vcombine.high %v944, %v944
        %v961 = vcombine.high %v951, %v951
        %v962 = vcombine.high %v958, %v958
        %971 = vst.msk [vmem:[%s316 + $0x1] sm:$0x1] %vm649, %v937
        %972 = vst.msk [vmem:[%s316 + $0x5] sm:$0x1] %vm649, %v951
        %973 = vst.msk [vmem:[%s316 + $0x9] sm:$0x1] %vm649, %v959
        %974 = vst.msk [vmem:[%s316 + $0xd] sm:$0x1] %vm649, %v961
        %975 = vst.msk [vmem:[%s316 + $0x11] sm:$0x1] %vm649, %v944
        %976 = vst.msk [vmem:[%s316 + $0x15] sm:$0x1] %vm649, %v958
        %977 = vst.msk [vmem:[%s316 + $0x19] sm:$0x1] %vm649, %v960
        %978 = vst.msk [vmem:[%s316 + $0x1d] sm:$0x1] %vm649, %v962
        %v979 = vld [vmem:[%s266 + $0x2] sm:$0x1]
        %v980 = vld [vmem:[%s266 + $0x6] sm:$0x1]
        %v981 = vld [vmem:[%s266 + $0xa] sm:$0x1]
        %v982 = vld [vmem:[%s266 + $0xe] sm:$0x1]
        %v983 = vld [vmem:[%s266 + $0x12] sm:$0x1]
        %v984 = vld [vmem:[%s266 + $0x16] sm:$0x1]
        %v985 = vld [vmem:[%s266 + $0x1a] sm:$0x1]
        %v986 = vld [vmem:[%s266 + $0x1e] sm:$0x1]
        %v987 = vmul.f32 %v979, 0.17677669
        %v988 = vmul.f32 %v980, 0.17677669
        %v989 = vmul.f32 %v981, 0.17677669
        %v990 = vmul.f32 %v982, 0.17677669
        %v991 = vmul.f32 %v983, 0.17677669
        %v992 = vmul.f32 %v984, 0.17677669
        %v993 = vmul.f32 %v985, 0.17677669
        %v994 = vmul.f32 %v986, 0.17677669
        %v995 = vpack.c.bf16 %v987, %v987
        %v996 = vpack.c.bf16 %v988, %v988
        %v997 = vpack.c.bf16 %v989, %v989
        %v998 = vpack.c.bf16 %v990, %v990
        %v999 = vpack.c.bf16 %v991, %v991
        %v1000 = vpack.c.bf16 %v992, %v992
        %v1001 = vpack.c.bf16 %v993, %v993
        %v1002 = vpack.c.bf16 %v994, %v994
        %v1003 = vld [vmem:[%s275 + $0x2] sm:$0x1]
        %v1004 = vld [vmem:[%s275 + $0x6] sm:$0x1]
        %v1005 = vld [vmem:[%s275 + $0xa] sm:$0x1]
        %v1006 = vld [vmem:[%s275 + $0xe] sm:$0x1]
        %v1007 = vld [vmem:[%s275 + $0x12] sm:$0x1]
        %v1008 = vld [vmem:[%s275 + $0x16] sm:$0x1]
        %v1009 = vld [vmem:[%s275 + $0x1a] sm:$0x1]
        %v1010 = vld [vmem:[%s275 + $0x1e] sm:$0x1]
        %v1011 = vpack.c.bf16 %v1003, %v1003
        %v1012 = vpack.c.bf16 %v1004, %v1004
        %v1013 = vpack.c.bf16 %v1005, %v1005
        %v1014 = vpack.c.bf16 %v1006, %v1006
        %v1015 = vpack.c.bf16 %v1007, %v1007
        %v1016 = vpack.c.bf16 %v1008, %v1008
        %v1017 = vpack.c.bf16 %v1009, %v1009
        %v1018 = vpack.c.bf16 %v1010, %v1010
        %v1027 = vunpack.c.l.b16 %v995
        %v1028 = vunpack.c.l.b16 %v996
        %v1029 = vunpack.c.l.b16 %v997
        %v1030 = vunpack.c.l.b16 %v998
        %v1031 = vunpack.c.l.b16 %v999
        %v1032 = vunpack.c.l.b16 %v1000
        %v1033 = vunpack.c.l.b16 %v1001
        %v1034 = vunpack.c.l.b16 %v1002
        %v1035 = vrot.slane %v1028, 7
        %v1036 = vsel %vm384, %v1035, %v1027
        %v1037 = vrot.slane %v1029, 6
        %v1038 = vsel %vm387, %v1037, %v1036
        %v1039 = vrot.slane %v1030, 5
        %v1040 = vsel %vm390, %v1039, %v1038
        %v1041 = vrot.slane %v1031, 4
        %v1042 = vsel %vm393, %v1041, %v1040
        %v1043 = vrot.slane %v1032, 3
        %v1044 = vsel %vm396, %v1043, %v1042
        %v1045 = vrot.slane %v1033, 2
        %v1046 = vsel %vm399, %v1045, %v1044
        %v1047 = vrot.slane %v1034, 1
        %v1048 = vsel %vm402, %v1047, %v1046
        %v1049 = vpack.c.b16 %v1048, %v1048
        %v1058 = vunpack.c.l.b16 %v1011
        %v1059 = vunpack.c.l.b16 %v1012
        %v1060 = vunpack.c.l.b16 %v1013
        %v1061 = vunpack.c.l.b16 %v1014
        %v1062 = vunpack.c.l.b16 %v1015
        %v1063 = vunpack.c.l.b16 %v1016
        %v1064 = vunpack.c.l.b16 %v1017
        %v1065 = vunpack.c.l.b16 %v1018
        %v1066 = vrot.slane %v1059, 7
        %v1067 = vsel %vm384, %v1066, %v1058
        %v1068 = vrot.slane %v1060, 6
        %v1069 = vsel %vm387, %v1068, %v1067
        %v1070 = vrot.slane %v1061, 5
        %v1071 = vsel %vm390, %v1070, %v1069
        %v1072 = vrot.slane %v1062, 4
        %v1073 = vsel %vm393, %v1072, %v1071
        %v1074 = vrot.slane %v1063, 3
        %v1075 = vsel %vm396, %v1074, %v1073
        %v1076 = vrot.slane %v1064, 2
        %v1077 = vsel %vm399, %v1076, %v1075
        %v1078 = vrot.slane %v1065, 1
        %v1079 = vsel %vm402, %v1078, %v1077
        %v1080 = vpack.c.b16 %v1079, %v1079
        %v1082 = vsel %vm436, %v1049, 0
        %v1085 = vsel %vm436, %v1080, 0
        %1087 = vmatprep.subr.bf16.mxu0 0
        %1088 = vmatpush1.bf16.xpose.msra.mxu0 %v1085
        %1089 = vmatprep.subr.bf16.mxu0 0
        %1090 = vmatpush1.bf16.xpose.msra.mxu0 0
        %1091 = vmatprep.subr.bf16.mxu0 0
        %1092 = vmatpush1.bf16.xpose.msra.mxu0 0
        %1093 = vmatprep.subr.bf16.mxu0 0
        %1094 = vmatpush1.bf16.xpose.msra.mxu0 0
        %1095 = vmatprep.subr.bf16.mxu0 0
        %1096 = vmatpush1.bf16.xpose.msra.mxu0 0
        %1097 = vmatprep.subr.bf16.mxu0 0
        %1098 = vmatpush1.bf16.xpose.msra.mxu0 0
        %1099 = vmatprep.subr.bf16.mxu0 0
        %1100 = vmatpush1.bf16.xpose.msra.mxu0 0
        %1101 = vmatprep.subr.bf16.mxu0 0
        %1102 = vmatpush1.bf16.xpose.msra.mxu0 0
        %1103 = vmatprep.subr.bf16.mxu0 0
        %1104 = vmatpush1.bf16.xpose.msra.mxu0 0
        %1105 = vmatprep.subr.bf16.mxu0 0
        %1106 = vmatpush1.bf16.xpose.msra.mxu0 0
        %1107 = vmatprep.subr.bf16.mxu0 0
        %1108 = vmatpush1.bf16.xpose.msra.mxu0 0
        %1109 = vmatprep.subr.bf16.mxu0 0
        %1110 = vmatpush1.bf16.xpose.msra.mxu0 0
        %1111 = vmatprep.subr.bf16.mxu0 0
        %1112 = vmatpush1.bf16.xpose.msra.mxu0 0
        %1113 = vmatprep.subr.bf16.mxu0 0
        %1114 = vmatpush1.bf16.xpose.msra.mxu0 0
        %1115 = vmatprep.subr.bf16.mxu0 0
        %1116 = vmatpush1.bf16.xpose.msra.mxu0 0
        %1117 = vmatprep.subr.bf16.mxu0 0
        %1118 = vmatpush1.bf16.xpose.msra.mxu0 0
        %1119 = vmatprep.mubr.bf16.mxu0 0
        %1120 = vmatmul.mubr.bf16.gmra.mrb[0].mxu0 %v1082
        %v1121 = vpop.f32.mrb[0].mxu0
        %v1122 = vadd.f32 0.0, %v1121
        %v1123 = vpop.f32.mrb[0].mxu0
        %v1124 = vpop.f32.mrb[0].mxu0
        %v1125 = vpop.f32.mrb[0].mxu0
        %1126 = vdwg.mxu0
        %v1127 = vsel %vm483, %v1122, -inf
        %1128 = vmax.xlane.f32.xlu0 %v1127
        %v1129 = vpop.xlane.xlu0 %1128
        %v1130 = vsub.f32 %v1122, %v1129
        %v1131 = vmul.f32 %v1130, 1.442695
        %v1132 = vpow.pop %v1131
        %v1133 = vsel %vm483, %v1132, 0.0
        %1134 = vadd.xlane.f32.xlu0 %v1133
        %v1135 = vpop.xlane.xlu0 %1134
        %v1136 = vrcp.pop %v1135
        %v1137 = vld [vmem:[%s284 + $0x2] sm:$0x1]
        %v1138 = vld [vmem:[%s284 + $0x6] sm:$0x1]
        %v1139 = vld [vmem:[%s284 + $0xa] sm:$0x1]
        %v1140 = vld [vmem:[%s284 + $0xe] sm:$0x1]
        %v1141 = vld [vmem:[%s284 + $0x12] sm:$0x1]
        %v1142 = vld [vmem:[%s284 + $0x16] sm:$0x1]
        %v1143 = vld [vmem:[%s284 + $0x1a] sm:$0x1]
        %v1144 = vld [vmem:[%s284 + $0x1e] sm:$0x1]
        %v1145 = vpack.c.bf16 %v1137, %v1137
        %v1146 = vpack.c.bf16 %v1138, %v1138
        %v1147 = vpack.c.bf16 %v1139, %v1139
        %v1148 = vpack.c.bf16 %v1140, %v1140
        %v1149 = vpack.c.bf16 %v1141, %v1141
        %v1150 = vpack.c.bf16 %v1142, %v1142
        %v1151 = vpack.c.bf16 %v1143, %v1143
        %v1152 = vpack.c.bf16 %v1144, %v1144
        %v1153 = vmul.f32 %v1132, %v1136
        %s1154 = scalar_lea.vmem %s323, 16 [#allocation9]
        %1155 = vst.msk [vmem:[%s1154] sm:$0xff] %vm483, %v1153
        %v1156 = vpack.c.bf16 %v1153, %v1153
        %v1165 = vunpack.c.l.b16 %v1145
        %v1166 = vunpack.c.l.b16 %v1146
        %v1167 = vunpack.c.l.b16 %v1147
        %v1168 = vunpack.c.l.b16 %v1148
        %v1169 = vunpack.c.l.b16 %v1149
        %v1170 = vunpack.c.l.b16 %v1150
        %v1171 = vunpack.c.l.b16 %v1151
        %v1172 = vunpack.c.l.b16 %v1152
        %v1173 = vrot.slane %v1166, 7
        %v1174 = vsel %vm384, %v1173, %v1165
        %v1175 = vrot.slane %v1167, 6
        %v1176 = vsel %vm387, %v1175, %v1174
        %v1177 = vrot.slane %v1168, 5
        %v1178 = vsel %vm390, %v1177, %v1176
        %v1179 = vrot.slane %v1169, 4
        %v1180 = vsel %vm393, %v1179, %v1178
        %v1181 = vrot.slane %v1170, 3
        %v1182 = vsel %vm396, %v1181, %v1180
        %v1183 = vrot.slane %v1171, 2
        %v1184 = vsel %vm399, %v1183, %v1182
        %v1185 = vrot.slane %v1172, 1
        %v1186 = vsel %vm402, %v1185, %v1184
        %v1187 = vpack.c.b16 %v1186, %v1186
        %v1189 = vsel %vm483, %v1156, 0
        %v1192 = vsel %vm547, %v1187, 0
        %1194 = vmatprep.subr.bf16.mxu0 0
        %1195 = vmatpush1.bf16.msra.mxu0 %v1192
        %1196 = vmatprep.subr.bf16.mxu0 0
        %1197 = vmatpush1.bf16.msra.mxu0 0
        %1198 = vmatprep.subr.bf16.mxu0 0
        %1199 = vmatpush1.bf16.msra.mxu0 0
        %1200 = vmatprep.subr.bf16.mxu0 0
        %1201 = vmatpush1.bf16.msra.mxu0 0
        %1202 = vmatprep.subr.bf16.mxu0 0
        %1203 = vmatpush1.bf16.msra.mxu0 0
        %1204 = vmatprep.subr.bf16.mxu0 0
        %1205 = vmatpush1.bf16.msra.mxu0 0
        %1206 = vmatprep.subr.bf16.mxu0 0
        %1207 = vmatpush1.bf16.msra.mxu0 0
        %1208 = vmatprep.subr.bf16.mxu0 0
        %1209 = vmatpush1.bf16.msra.mxu0 0
        %1210 = vmatprep.subr.bf16.mxu0 0
        %1211 = vmatpush1.bf16.msra.mxu0 0
        %1212 = vmatprep.subr.bf16.mxu0 0
        %1213 = vmatpush1.bf16.msra.mxu0 0
        %1214 = vmatprep.subr.bf16.mxu0 0
        %1215 = vmatpush1.bf16.msra.mxu0 0
        %1216 = vmatprep.subr.bf16.mxu0 0
        %1217 = vmatpush1.bf16.msra.mxu0 0
        %1218 = vmatprep.subr.bf16.mxu0 0
        %1219 = vmatpush1.bf16.msra.mxu0 0
        %1220 = vmatprep.subr.bf16.mxu0 0
        %1221 = vmatpush1.bf16.msra.mxu0 0
        %1222 = vmatprep.subr.bf16.mxu0 0
        %1223 = vmatpush1.bf16.msra.mxu0 0
        %1224 = vmatprep.subr.bf16.mxu0 0
        %1225 = vmatpush1.bf16.msra.mxu0 0
        %1226 = vmatprep.mubr.bf16.mxu0 0
        %1227 = vmatmul.mubr.bf16.gmra.mrb[0].mxu0 %v1189
        %v1228 = vpop.f32.mrb[0].mxu0
        %v1229 = vadd.f32 0.0, %v1228
        %v1230 = vpop.f32.mrb[0].mxu0
        %v1231 = vpop.f32.mrb[0].mxu0
        %v1232 = vpop.f32.mrb[0].mxu0
        %1233 = vdwg.mxu0
        %v1235 = vcombine.high %v1229, %v1229
        %v1237 = vunpack.c.l.s4 1966171168
        %v1238 = vunpack.c.0.s8 %v1237
        %v1239 = vlaneseq
        %v1240 = vshrl.u32 %v1239, 7
        %v1241 = vsub.s32 %v1238, %v1240
        %v1242 = vrot.slane %v1229, %v1241
        %v1244 = vunpack.c.l.s4 1966171168
        %v1245 = vunpack.c.0.s8 %v1244
        %v1246 = vlaneseq
        %v1247 = vshrl.u32 %v1246, 7
        %v1248 = vsub.s32 %v1245, %v1247
        %v1249 = vrot.slane %v1235, %v1248
        %v1250 = vcombine.high %v1242, %v1242
        %v1251 = vcombine.high %v1249, %v1249
        %v1253 = vunpack.c.l.s4 1966171168
        %v1254 = vunpack.c.0.s8 %v1253
        %v1255 = vlaneseq
        %v1256 = vshrl.u32 %v1255, 7
        %v1257 = vsub.s32 %v1254, %v1256
        %v1258 = vrot.slane %v1242, %v1257
        %v1260 = vunpack.c.l.s4 1966171168
        %v1261 = vunpack.c.0.s8 %v1260
        %v1262 = vlaneseq
        %v1263 = vshrl.u32 %v1262, 7
        %v1264 = vsub.s32 %v1261, %v1263
        %v1265 = vrot.slane %v1249, %v1264
        %v1267 = vunpack.c.l.s4 1966171168
        %v1268 = vunpack.c.0.s8 %v1267
        %v1269 = vlaneseq
        %v1270 = vshrl.u32 %v1269, 7
        %v1271 = vsub.s32 %v1268, %v1270
        %v1272 = vrot.slane %v1250, %v1271
        %v1274 = vunpack.c.l.s4 1966171168
        %v1275 = vunpack.c.0.s8 %v1274
        %v1276 = vlaneseq
        %v1277 = vshrl.u32 %v1276, 7
        %v1278 = vsub.s32 %v1275, %v1277
        %v1279 = vrot.slane %v1251, %v1278
        %v1280 = vcombine.high %v1258, %v1258
        %v1281 = vcombine.high %v1265, %v1265
        %v1282 = vcombine.high %v1272, %v1272
        %v1283 = vcombine.high %v1279, %v1279
        %1292 = vst.msk [vmem:[%s316 + $0x2] sm:$0x1] %vm649, %v1258
        %1293 = vst.msk [vmem:[%s316 + $0x6] sm:$0x1] %vm649, %v1272
        %1294 = vst.msk [vmem:[%s316 + $0xa] sm:$0x1] %vm649, %v1280
        %1295 = vst.msk [vmem:[%s316 + $0xe] sm:$0x1] %vm649, %v1282
        %1296 = vst.msk [vmem:[%s316 + $0x12] sm:$0x1] %vm649, %v1265
        %1297 = vst.msk [vmem:[%s316 + $0x16] sm:$0x1] %vm649, %v1279
        %1298 = vst.msk [vmem:[%s316 + $0x1a] sm:$0x1] %vm649, %v1281
        %1299 = vst.msk [vmem:[%s316 + $0x1e] sm:$0x1] %vm649, %v1283
        %v1300 = vld [vmem:[%s266 + $0x3] sm:$0x1]
        %v1301 = vld [vmem:[%s266 + $0x7] sm:$0x1]
        %v1302 = vld [vmem:[%s266 + $0xb] sm:$0x1]
        %v1303 = vld [vmem:[%s266 + $0xf] sm:$0x1]
        %v1304 = vld [vmem:[%s266 + $0x13] sm:$0x1]
        %v1305 = vld [vmem:[%s266 + $0x17] sm:$0x1]
        %v1306 = vld [vmem:[%s266 + $0x1b] sm:$0x1]
        %v1307 = vld [vmem:[%s266 + $0x1f] sm:$0x1]
        %v1308 = vmul.f32 %v1300, 0.17677669
        %v1309 = vmul.f32 %v1301, 0.17677669
        %v1310 = vmul.f32 %v1302, 0.17677669
        %v1311 = vmul.f32 %v1303, 0.17677669
        %v1312 = vmul.f32 %v1304, 0.17677669
        %v1313 = vmul.f32 %v1305, 0.17677669
        %v1314 = vmul.f32 %v1306, 0.17677669
        %v1315 = vmul.f32 %v1307, 0.17677669
        %v1316 = vpack.c.bf16 %v1308, %v1308
        %v1317 = vpack.c.bf16 %v1309, %v1309
        %v1318 = vpack.c.bf16 %v1310, %v1310
        %v1319 = vpack.c.bf16 %v1311, %v1311
        %v1320 = vpack.c.bf16 %v1312, %v1312
        %v1321 = vpack.c.bf16 %v1313, %v1313
        %v1322 = vpack.c.bf16 %v1314, %v1314
        %v1323 = vpack.c.bf16 %v1315, %v1315
        %v1324 = vld [vmem:[%s275 + $0x3] sm:$0x1]
        %v1325 = vld [vmem:[%s275 + $0x7] sm:$0x1]
        %v1326 = vld [vmem:[%s275 + $0xb] sm:$0x1]
        %v1327 = vld [vmem:[%s275 + $0xf] sm:$0x1]
        %v1328 = vld [vmem:[%s275 + $0x13] sm:$0x1]
        %v1329 = vld [vmem:[%s275 + $0x17] sm:$0x1]
        %v1330 = vld [vmem:[%s275 + $0x1b] sm:$0x1]
        %v1331 = vld [vmem:[%s275 + $0x1f] sm:$0x1]
        %v1332 = vpack.c.bf16 %v1324, %v1324
        %v1333 = vpack.c.bf16 %v1325, %v1325
        %v1334 = vpack.c.bf16 %v1326, %v1326
        %v1335 = vpack.c.bf16 %v1327, %v1327
        %v1336 = vpack.c.bf16 %v1328, %v1328
        %v1337 = vpack.c.bf16 %v1329, %v1329
        %v1338 = vpack.c.bf16 %v1330, %v1330
        %v1339 = vpack.c.bf16 %v1331, %v1331
        %v1348 = vunpack.c.l.b16 %v1316
        %v1349 = vunpack.c.l.b16 %v1317
        %v1350 = vunpack.c.l.b16 %v1318
        %v1351 = vunpack.c.l.b16 %v1319
        %v1352 = vunpack.c.l.b16 %v1320
        %v1353 = vunpack.c.l.b16 %v1321
        %v1354 = vunpack.c.l.b16 %v1322
        %v1355 = vunpack.c.l.b16 %v1323
        %v1356 = vrot.slane %v1349, 7
        %v1357 = vsel %vm384, %v1356, %v1348
        %v1358 = vrot.slane %v1350, 6
        %v1359 = vsel %vm387, %v1358, %v1357
        %v1360 = vrot.slane %v1351, 5
        %v1361 = vsel %vm390, %v1360, %v1359
        %v1362 = vrot.slane %v1352, 4
        %v1363 = vsel %vm393, %v1362, %v1361
        %v1364 = vrot.slane %v1353, 3
        %v1365 = vsel %vm396, %v1364, %v1363
        %v1366 = vrot.slane %v1354, 2
        %v1367 = vsel %vm399, %v1366, %v1365
        %v1368 = vrot.slane %v1355, 1
        %v1369 = vsel %vm402, %v1368, %v1367
        %v1370 = vpack.c.b16 %v1369, %v1369
        %v1379 = vunpack.c.l.b16 %v1332
        %v1380 = vunpack.c.l.b16 %v1333
        %v1381 = vunpack.c.l.b16 %v1334
        %v1382 = vunpack.c.l.b16 %v1335
        %v1383 = vunpack.c.l.b16 %v1336
        %v1384 = vunpack.c.l.b16 %v1337
        %v1385 = vunpack.c.l.b16 %v1338
        %v1386 = vunpack.c.l.b16 %v1339
        %v1387 = vrot.slane %v1380, 7
        %v1388 = vsel %vm384, %v1387, %v1379
        %v1389 = vrot.slane %v1381, 6
        %v1390 = vsel %vm387, %v1389, %v1388
        %v1391 = vrot.slane %v1382, 5
        %v1392 = vsel %vm390, %v1391, %v1390
        %v1393 = vrot.slane %v1383, 4
        %v1394 = vsel %vm393, %v1393, %v1392
        %v1395 = vrot.slane %v1384, 3
        %v1396 = vsel %vm396, %v1395, %v1394
        %v1397 = vrot.slane %v1385, 2
        %v1398 = vsel %vm399, %v1397, %v1396
        %v1399 = vrot.slane %v1386, 1
        %v1400 = vsel %vm402, %v1399, %v1398
        %v1401 = vpack.c.b16 %v1400, %v1400
        %v1403 = vsel %vm436, %v1370, 0
        %v1406 = vsel %vm436, %v1401, 0
        %1408 = vmatprep.subr.bf16.mxu0 0
        %1409 = vmatpush1.bf16.xpose.msra.mxu0 %v1406
        %1410 = vmatprep.subr.bf16.mxu0 0
        %1411 = vmatpush1.bf16.xpose.msra.mxu0 0
        %1412 = vmatprep.subr.bf16.mxu0 0
        %1413 = vmatpush1.bf16.xpose.msra.mxu0 0
        %1414 = vmatprep.subr.bf16.mxu0 0
        %1415 = vmatpush1.bf16.xpose.msra.mxu0 0
        %1416 = vmatprep.subr.bf16.mxu0 0
        %1417 = vmatpush1.bf16.xpose.msra.mxu0 0
        %1418 = vmatprep.subr.bf16.mxu0 0
        %1419 = vmatpush1.bf16.xpose.msra.mxu0 0
        %1420 = vmatprep.subr.bf16.mxu0 0
        %1421 = vmatpush1.bf16.xpose.msra.mxu0 0
        %1422 = vmatprep.subr.bf16.mxu0 0
        %1423 = vmatpush1.bf16.xpose.msra.mxu0 0
        %1424 = vmatprep.subr.bf16.mxu0 0
        %1425 = vmatpush1.bf16.xpose.msra.mxu0 0
        %1426 = vmatprep.subr.bf16.mxu0 0
        %1427 = vmatpush1.bf16.xpose.msra.mxu0 0
        %1428 = vmatprep.subr.bf16.mxu0 0
        %1429 = vmatpush1.bf16.xpose.msra.mxu0 0
        %1430 = vmatprep.subr.bf16.mxu0 0
        %1431 = vmatpush1.bf16.xpose.msra.mxu0 0
        %1432 = vmatprep.subr.bf16.mxu0 0
        %1433 = vmatpush1.bf16.xpose.msra.mxu0 0
        %1434 = vmatprep.subr.bf16.mxu0 0
        %1435 = vmatpush1.bf16.xpose.msra.mxu0 0
        %1436 = vmatprep.subr.bf16.mxu0 0
        %1437 = vmatpush1.bf16.xpose.msra.mxu0 0
        %1438 = vmatprep.subr.bf16.mxu0 0
        %1439 = vmatpush1.bf16.xpose.msra.mxu0 0
        %1440 = vmatprep.mubr.bf16.mxu0 0
        %1441 = vmatmul.mubr.bf16.gmra.mrb[0].mxu0 %v1403
        %v1442 = vpop.f32.mrb[0].mxu0
        %v1443 = vadd.f32 0.0, %v1442
        %v1444 = vpop.f32.mrb[0].mxu0
        %v1445 = vpop.f32.mrb[0].mxu0
        %v1446 = vpop.f32.mrb[0].mxu0
        %1447 = vdwg.mxu0
        %v1448 = vsel %vm483, %v1443, -inf
        %1449 = vmax.xlane.f32.xlu0 %v1448
        %v1450 = vpop.xlane.xlu0 %1449
        %v1451 = vsub.f32 %v1443, %v1450
        %v1452 = vmul.f32 %v1451, 1.442695
        %v1453 = vpow.pop %v1452
        %v1454 = vsel %vm483, %v1453, 0.0
        %1455 = vadd.xlane.f32.xlu0 %v1454
        %v1456 = vpop.xlane.xlu0 %1455
        %v1457 = vrcp.pop %v1456
        %v1458 = vld [vmem:[%s284 + $0x3] sm:$0x1]
        %v1459 = vld [vmem:[%s284 + $0x7] sm:$0x1]
        %v1460 = vld [vmem:[%s284 + $0xb] sm:$0x1]
        %v1461 = vld [vmem:[%s284 + $0xf] sm:$0x1]
        %v1462 = vld [vmem:[%s284 + $0x13] sm:$0x1]
        %v1463 = vld [vmem:[%s284 + $0x17] sm:$0x1]
        %v1464 = vld [vmem:[%s284 + $0x1b] sm:$0x1]
        %v1465 = vld [vmem:[%s284 + $0x1f] sm:$0x1]
        %v1466 = vpack.c.bf16 %v1458, %v1458
        %v1467 = vpack.c.bf16 %v1459, %v1459
        %v1468 = vpack.c.bf16 %v1460, %v1460
        %v1469 = vpack.c.bf16 %v1461, %v1461
        %v1470 = vpack.c.bf16 %v1462, %v1462
        %v1471 = vpack.c.bf16 %v1463, %v1463
        %v1472 = vpack.c.bf16 %v1464, %v1464
        %v1473 = vpack.c.bf16 %v1465, %v1465
        %v1474 = vmul.f32 %v1453, %v1457
        %s1475 = scalar_lea.vmem %s323, 24 [#allocation9]
        %1476 = vst.msk [vmem:[%s1475] sm:$0xff] %vm483, %v1474
        %v1477 = vpack.c.bf16 %v1474, %v1474
        %v1486 = vunpack.c.l.b16 %v1466
        %v1487 = vunpack.c.l.b16 %v1467
        %v1488 = vunpack.c.l.b16 %v1468
        %v1489 = vunpack.c.l.b16 %v1469
        %v1490 = vunpack.c.l.b16 %v1470
        %v1491 = vunpack.c.l.b16 %v1471
        %v1492 = vunpack.c.l.b16 %v1472
        %v1493 = vunpack.c.l.b16 %v1473
        %v1494 = vrot.slane %v1487, 7
        %v1495 = vsel %vm384, %v1494, %v1486
        %v1496 = vrot.slane %v1488, 6
        %v1497 = vsel %vm387, %v1496, %v1495
        %v1498 = vrot.slane %v1489, 5
        %v1499 = vsel %vm390, %v1498, %v1497
        %v1500 = vrot.slane %v1490, 4
        %v1501 = vsel %vm393, %v1500, %v1499
        %v1502 = vrot.slane %v1491, 3
        %v1503 = vsel %vm396, %v1502, %v1501
        %v1504 = vrot.slane %v1492, 2
        %v1505 = vsel %vm399, %v1504, %v1503
        %v1506 = vrot.slane %v1493, 1
        %v1507 = vsel %vm402, %v1506, %v1505
        %v1508 = vpack.c.b16 %v1507, %v1507
        %v1510 = vsel %vm483, %v1477, 0
        %v1513 = vsel %vm547, %v1508, 0
        %1515 = vmatprep.subr.bf16.mxu0 0
        %1516 = vmatpush1.bf16.msra.mxu0 %v1513
        %1517 = vmatprep.subr.bf16.mxu0 0
        %1518 = vmatpush1.bf16.msra.mxu0 0
        %1519 = vmatprep.subr.bf16.mxu0 0
        %1520 = vmatpush1.bf16.msra.mxu0 0
        %1521 = vmatprep.subr.bf16.mxu0 0
        %1522 = vmatpush1.bf16.msra.mxu0 0
        %1523 = vmatprep.subr.bf16.mxu0 0
        %1524 = vmatpush1.bf16.msra.mxu0 0
        %1525 = vmatprep.subr.bf16.mxu0 0
        %1526 = vmatpush1.bf16.msra.mxu0 0
        %1527 = vmatprep.subr.bf16.mxu0 0
        %1528 = vmatpush1.bf16.msra.mxu0 0
        %1529 = vmatprep.subr.bf16.mxu0 0
        %1530 = vmatpush1.bf16.msra.mxu0 0
        %1531 = vmatprep.subr.bf16.mxu0 0
        %1532 = vmatpush1.bf16.msra.mxu0 0
        %1533 = vmatprep.subr.bf16.mxu0 0
        %1534 = vmatpush1.bf16.msra.mxu0 0
        %1535 = vmatprep.subr.bf16.mxu0 0
        %1536 = vmatpush1.bf16.msra.mxu0 0
        %1537 = vmatprep.subr.bf16.mxu0 0
        %1538 = vmatpush1.bf16.msra.mxu0 0
        %1539 = vmatprep.subr.bf16.mxu0 0
        %1540 = vmatpush1.bf16.msra.mxu0 0
        %1541 = vmatprep.subr.bf16.mxu0 0
        %1542 = vmatpush1.bf16.msra.mxu0 0
        %1543 = vmatprep.subr.bf16.mxu0 0
        %1544 = vmatpush1.bf16.msra.mxu0 0
        %1545 = vmatprep.subr.bf16.mxu0 0
        %1546 = vmatpush1.bf16.msra.mxu0 0
        %1547 = vmatprep.mubr.bf16.mxu0 0
        %1548 = vmatmul.mubr.bf16.gmra.mrb[0].mxu0 %v1510
        %v1549 = vpop.f32.mrb[0].mxu0
        %v1550 = vadd.f32 0.0, %v1549
        %v1551 = vpop.f32.mrb[0].mxu0
        %v1552 = vpop.f32.mrb[0].mxu0
        %v1553 = vpop.f32.mrb[0].mxu0
        %1554 = vdwg.mxu0
        %v1556 = vcombine.high %v1550, %v1550
        %v1558 = vunpack.c.l.s4 1966171168
        %v1559 = vunpack.c.0.s8 %v1558
        %v1560 = vlaneseq
        %v1561 = vshrl.u32 %v1560, 7
        %v1562 = vsub.s32 %v1559, %v1561
        %v1563 = vrot.slane %v1550, %v1562
        %v1565 = vunpack.c.l.s4 1966171168
        %v1566 = vunpack.c.0.s8 %v1565
        %v1567 = vlaneseq
        %v1568 = vshrl.u32 %v1567, 7
        %v1569 = vsub.s32 %v1566, %v1568
        %v1570 = vrot.slane %v1556, %v1569
        %v1571 = vcombine.high %v1563, %v1563
        %v1572 = vcombine.high %v1570, %v1570
        %v1574 = vunpack.c.l.s4 1966171168
        %v1575 = vunpack.c.0.s8 %v1574
        %v1576 = vlaneseq
        %v1577 = vshrl.u32 %v1576, 7
        %v1578 = vsub.s32 %v1575, %v1577
        %v1579 = vrot.slane %v1563, %v1578
        %v1581 = vunpack.c.l.s4 1966171168
        %v1582 = vunpack.c.0.s8 %v1581
        %v1583 = vlaneseq
        %v1584 = vshrl.u32 %v1583, 7
        %v1585 = vsub.s32 %v1582, %v1584
        %v1586 = vrot.slane %v1570, %v1585
        %v1588 = vunpack.c.l.s4 1966171168
        %v1589 = vunpack.c.0.s8 %v1588
        %v1590 = vlaneseq
        %v1591 = vshrl.u32 %v1590, 7
        %v1592 = vsub.s32 %v1589, %v1591
        %v1593 = vrot.slane %v1571, %v1592
        %v1595 = vunpack.c.l.s4 1966171168
        %v1596 = vunpack.c.0.s8 %v1595
        %v1597 = vlaneseq
        %v1598 = vshrl.u32 %v1597, 7
        %v1599 = vsub.s32 %v1596, %v1598
        %v1600 = vrot.slane %v1572, %v1599
        %v1601 = vcombine.high %v1579, %v1579
        %v1602 = vcombine.high %v1586, %v1586
        %v1603 = vcombine.high %v1593, %v1593
        %v1604 = vcombine.high %v1600, %v1600
        %1613 = vst.msk [vmem:[%s316 + $0x3] sm:$0x1] %vm649, %v1579
        %1614 = vst.msk [vmem:[%s316 + $0x7] sm:$0x1] %vm649, %v1593
        %1615 = vst.msk [vmem:[%s316 + $0xb] sm:$0x1] %vm649, %v1601
        %1616 = vst.msk [vmem:[%s316 + $0xf] sm:$0x1] %vm649, %v1603
        %1617 = vst.msk [vmem:[%s316 + $0x13] sm:$0x1] %vm649, %v1586
        %1618 = vst.msk [vmem:[%s316 + $0x17] sm:$0x1] %vm649, %v1600
        %1619 = vst.msk [vmem:[%s316 + $0x1b] sm:$0x1] %vm649, %v1602
        %1620 = vst.msk [vmem:[%s316 + $0x1f] sm:$0x1] %vm649, %v1604
        %s1621 = sand.u32 %s130, 1
        %s1622 = scalar_lea.sflag [#allocation4], %s1621
        %s1623 = sand.u32 %s130, 1
        %s1624 = smul.addr %s1623, 32
        %s1625 = scalar_lea.vmem [#allocation8], %s1624
        %s1626 = sand.u32 %s158, 1
        %s1627 = scalar_lea.sflag [#allocation10], %s1626
        %s1628 = sand.u32 %s158, 1
        %s1629 = smul.addr %s1628, 32
        %s1630 = scalar_lea.vmem [#allocation9], %s1629
        // Predicated region
        $region45: #{tpu_custom_call.1} parent=31 // pred_check
          %p1631 = pneg %p140
        $region46: #{tpu_custom_call.1} parent=31 // pred_check_branch
          %1633 = sbr.rel (%p1631) target = $region48
        $region47: #{tpu_custom_call.1} parent=31 // pred_region
          %s1634 = smul.u32 8, %s33
          %s1636 = ssub.s32 512, 512
          %1637 = vsyncadd %s1622, %s1636
          %s1638 = smul.addr %s32, 8
          %s1639 = sadd.s32 %s1634, %s1638
          %s1640 = smul.addr %s1639, 64
          %s1641 = scalar_lea.hbm %s3, %s1640
          %s1642 = sshll.u32 %s1625, 4
          %s1643 = int_to_ptr.vmem [resolvable:$true] %s1642
          %1648 = dma.vmem_to_hbm [thread:$0]  %s1643, 512, %s1641, %s1622, 64, 64, 4
        $region48: #{tpu_custom_call.1} parent=31 // pred_fallthru
          _
        // Predicated region
        $region49: #{tpu_custom_call.1} parent=31 // pred_check
          %p1649 = pneg %p168
        $region50: #{tpu_custom_call.1} parent=31 // pred_check_branch
          %1651 = sbr.rel (%p1649) target = $region52
        $region51: #{tpu_custom_call.1} parent=31 // pred_region
          %s1653 = ssub.s32 512, 512
          %1654 = vsyncadd %s1627, %s1653
          %s1655 = smul.addr %s32, 4
          %s1656 = sadd.s32 %s33, %s1655
          %s1657 = smul.addr %s1656, 128
          %s1658 = scalar_lea.hbm %s4, %s1657
          %s1659 = sshll.u32 %s1630, 4
          %s1660 = int_to_ptr.vmem [resolvable:$true] %s1659
          %1665 = dma.vmem_to_hbm [thread:$0]  %s1660, 512, %s1658, %s1627, 128, 128, 8
        $region52: #{tpu_custom_call.1} parent=31 // pred_fallthru
          _
      $region32: #{tpu_custom_call.1} parent=5 // pred_fallthru
        _
      %p1666 = scmp.le.s32.totalorder 2, %s23
      // Predicated region
      $region53: #{tpu_custom_call.1} parent=5 // pred_check
        %p1667 = pneg %p1666
      $region54: #{tpu_custom_call.1} parent=5 // pred_check_branch
        %1669 = sbr.rel (%p1667) target = $region56
      $region55: #{tpu_custom_call.1} parent=5 // pred_region
        %s1670 = ssub.s32 %s23, 2
        // Predicated region
        $region57: #{tpu_custom_call.1} parent=55 // pred_check
          %p1671 = pneg %p146
        $region58: #{tpu_custom_call.1} parent=55 // pred_check_branch
          %1673 = sbr.rel (%p1671) target = $region60
        $region59: #{tpu_custom_call.1} parent=55 // pred_region
          %s1674 = sand.u32 %s131, 1
          %s1675 = scalar_lea.sflag [#allocation4], %s1674
          %s1676 = sand.u32 %s131, 1
          %s1677 = smul.addr %s1676, 32
          %s1678 = scalar_lea.vmem [#allocation8], %s1677
          %1679 = dma.done %s1675, 512
        $region60: #{tpu_custom_call.1} parent=55 // pred_fallthru
          _
        // Predicated region
        $region61: #{tpu_custom_call.1} parent=55 // pred_check
          %p1680 = pneg %p174
        $region62: #{tpu_custom_call.1} parent=55 // pred_check_branch
          %1682 = sbr.rel (%p1680) target = $region64
        $region63: #{tpu_custom_call.1} parent=55 // pred_region
          %s1683 = sand.u32 %s159, 1
          %s1684 = scalar_lea.sflag [#allocation10], %s1683
          %s1685 = sand.u32 %s159, 1
          %s1686 = smul.addr %s1685, 32
          %s1687 = scalar_lea.vmem [#allocation9], %s1686
          %1688 = dma.done %s1684, 512
        $region64: #{tpu_custom_call.1} parent=55 // pred_fallthru
          _
      $region56: #{tpu_custom_call.1} parent=5 // pred_fallthru
        _
    $region6: #{tpu_custom_call.1} parent=1 // loop_footer
      %s27 = sadd.s32 1, %s23
    $region7: #{tpu_custom_call.1} parent=1 // loop_footer_branch
      %22 = sbr.rel target = $region3
    $region8: #{tpu_custom_call.1} parent=1 // loop_exit
      _
    %1689 = vsyncpa [#allocation3], 1
    %s1690 = scalar_lea.sflag [#allocation3], 1
    %1691 = vsyncpa %s1690, 1
    %1692 = vsyncpa [#allocation6], 1
    %s1693 = scalar_lea.sflag [#allocation6], 1
    %1694 = vsyncpa %s1693, 1
    %1695 = vsyncpa [#allocation4], 1
    %s1696 = scalar_lea.sflag [#allocation4], 1
    %1697 = vsyncpa %s1696, 1
    %1698 = vsyncpa [#allocation10], 1
    %s1699 = scalar_lea.sflag [#allocation10], 1
    %1700 = vsyncpa %s1699, 1

</llo_original>
